<compile_context>
chip_gen: v7x
topology: tpu7x:2x2x1
jax: 0.10.0
libtpu: 0.0.40
codegen_flags: <defaults>
</compile_context>

<pallas_src>
import numpy as np

import jax
import jax.numpy as jnp
from jax import lax
from jax.experimental import pallas as pl
from jax.experimental.pallas import tpu as pltpu


# ------------------------------ Pallas kernel -------------------------------

def _lenet_kernel(lhs1_ref, t1_ref, b1_ref, t2_ref, b2_ref,
                  f1_ref, fb1_ref, f2_ref, fb2_ref, f3_ref, fb3_ref, o_ref):
    f32, bf16 = jnp.float32, jnp.bfloat16
    bt = lhs1_ref.shape[1] // 32          # samples in this batch tile
    rup = o_ref.shape[1]                  # batch tile rounded up to 8 rows

    # ---- conv1 + bias + relu: ONE contraction, rows ordered (p, b, g, k) ----
    # Row p*(bt*16) + b*16 + g*8 + k is conv row h2 = 4k + 2g + p of sample b;
    # output lanes are q*128 + w2*6 + c with q the output-column parity.
    y1 = jnp.dot(lhs1_ref[0], t1_ref[...], preferred_element_type=f32)   # [bt*32,256]
    y1 = jnp.maximum(y1 + b1_ref[...], 0.0)
    # 2x2 max pool: width = max over column parity q, height = max over row parity p.
    y1 = jnp.maximum(y1[:, :128], y1[:, 128:])                  # [bt*32, 128]
    p1 = jnp.maximum(y1[:bt * 16, :], y1[bt * 16:, :])          # [bt*16, 128]
    # pool1[b, g, k, w2*6 + c] holds pooled row m2 = 2k + g; pad k-axis 8 -> 16
    p1 = p1.reshape(bt, 2, 8, 128)
    p1 = jnp.concatenate([p1, jnp.zeros((bt, 2, 8, 128), f32)], axis=2)

    # ---- conv2 LHS slab: rows = (p3, b, m3<8), lanes = i*128 + pool1 lane ----
    # Conv2 output row h3 = 2*m3 + p3 reads pool1 row m2 = h3 + i, i.e.
    # g = (p3+i) % 2 and k = m3 + (p3+i)//2.
    cols = []
    for i in range(5):
        halves = []
        for p3 in range(2):
            g, o = (p3 + i) % 2, (p3 + i) // 2
            halves.append(p1[:, g, o:o + 8, :].reshape(bt * 8, 128))
        cols.append(jnp.concatenate(halves, axis=0))            # [bt*16, 128]
    lhs2 = jnp.concatenate(cols, axis=-1)                       # [bt*16, 640]

    # ---- conv2 + bias + relu + 2x2 max pool (single K=640 contraction) ------
    y2 = jnp.dot(lhs2.astype(bf16), t2_ref[...], preferred_element_type=f32)
    y2 = jnp.maximum(y2 + b2_ref[...], 0.0)                     # [bt*16, 256]
    y2 = jnp.maximum(y2[:, :128], y2[:, 128:])                  # width pool
    p2 = jnp.maximum(y2[:bt * 8, :], y2[bt * 8:, :])            # height pool [bt*8,128]
    p2 = p2.reshape(bt, 8, 128)                                 # rows m3 (0..4 valid)

    # ---- fully-connected head: [bt, 640] slab, single dot per layer ---------
    fcin = jnp.concatenate([p2[:, h, :] for h in range(5)], axis=-1)   # [bt, 640]
    if rup > bt:                                                # pad rows to 8-mult
        fcin = jnp.concatenate([fcin, jnp.zeros((rup - bt, 640), f32)], axis=0)
    h1 = jnp.maximum(jnp.dot(fcin.astype(bf16), f1_ref[...],
                             preferred_element_type=f32) + fb1_ref[...], 0.0)
    h2 = jnp.maximum(jnp.dot(h1.astype(bf16), f2_ref[...],
                             preferred_element_type=f32) + fb2_ref[...], 0.0)
    o_ref[0] = jnp.dot(h2.astype(bf16), f3_ref[...],
                       preferred_element_type=f32) + fb3_ref[...]      # [rup, 128]


# --------------------------- weight preprocessing ---------------------------

def prepare_params(p):
    """Expand PyTorch-layout LeNet params into K-fused, lane-dense, bf16 MXU
    operands (+ f32 biases).  Host-side, once."""
    w1 = np.asarray(p["conv1_w"], np.float32)   # [6, 1, 5, 5]
    b1 = np.asarray(p["conv1_b"], np.float32)
    w2 = np.asarray(p["conv2_w"], np.float32)   # [16, 6, 5, 5]
    b2 = np.asarray(p["conv2_b"], np.float32)
    fw1 = np.asarray(p["fc1_w"], np.float32)    # [120, 400]
    fb1 = np.asarray(p["fc1_b"], np.float32)
    fw2 = np.asarray(p["fc2_w"], np.float32)    # [84, 120]
    fb2 = np.asarray(p["fc2_b"], np.float32)
    fw3 = np.asarray(p["fc3_w"], np.float32)    # [10, 84]
    fb3 = np.asarray(p["fc3_b"], np.float32)

    # conv1 Toeplitz, fused over kernel rows i:
    #   T1[i*32 + v, q*128 + w2*6 + c] = w1[c, 0, i, v - (2*w2 + q)]
    T1 = np.zeros((5, 32, 256), np.float32)
    b1e = np.zeros((1, 256), np.float32)
    for q in range(2):
        for wp in range(14):
            col = q * 128 + wp * 6
            b1e[0, col:col + 6] = b1
            for i in range(5):
                for j in range(5):
                    T1[i, 2 * wp + q + j, col:col + 6] = w1[:, 0, i, j]

    # conv2 Toeplitz over pool1 lanes (w2*6 + c), fused over kernel rows i:
    #   T2[i*128 + w2*6 + c, q*128 + w3*16 + c'] = w2[c', c, i, w2 - (2*w3 + q)]
    T2 = np.zeros((5, 128, 256), np.float32)
    b2e = np.zeros((1, 256), np.float32)
    for q in range(2):
        for w3 in range(5):
            col = q * 128 + w3 * 16
            b2e[0, col:col + 16] = b2
            for i in range(5):
                for j in range(5):
                    wi = 2 * w3 + q + j
                    for c in range(6):
                        T2[i, wi * 6 + c, col:col + 16] = w2[:, c, i, j]

    # fc1 with PyTorch's NCHW flatten (idx = c*25 + h*5 + w) absorbed into the
    # permutation; kernel feeds activations with lanes (h*128 + w*16 + c).
    F1 = np.zeros((5, 128, 128), np.float32)
    for h in range(5):
        for w in range(5):
            for c in range(16):
                F1[h, w * 16 + c, :120] = fw1[:, c * 25 + h * 5 + w]
    fb1e = np.zeros((1, 128), np.float32); fb1e[0, :120] = fb1
    F2 = np.zeros((128, 128), np.float32); F2[:120, :84] = fw2.T
    fb2e = np.zeros((1, 128), np.float32); fb2e[0, :84] = fb2
    F3 = np.zeros((128, 128), np.float32); F3[:84, :10] = fw3.T
    fb3e = np.zeros((1, 128), np.float32); fb3e[0, :10] = fb3

    bf16 = jnp.bfloat16
    return {
        "T1": jnp.asarray(T1.reshape(160, 256), bf16),
        "b1": jnp.asarray(b1e),
        "T2": jnp.asarray(T2.reshape(640, 256), bf16),
        "b2": jnp.asarray(b2e),
        "F1": jnp.asarray(F1.reshape(640, 128), bf16),
        "fb1": jnp.asarray(fb1e),
        "F2": jnp.asarray(F2, bf16),
        "fb2": jnp.asarray(fb2e),
        "F3": jnp.asarray(F3, bf16),
        "fb3": jnp.asarray(fb3e),
    }


# ------------------------------ XLA-glue im2row ------------------------------

def _conv1_im2row(x, batch_tile):
    """conv1 im2row in XLA glue: [B,1,32,32] -> [nT, Bt*32, 160] bf16.

    Per tile, rows are ordered (p, b, g, k) with conv row h2 = 4k + 2g + p
    (k = 7 is sublane padding); lanes are i*32 + v, so conv1 becomes a single
    lane-dense K=160 contraction inside the kernel."""
    B = x.shape[0]
    Bt = batch_tile
    nT = B // Bt
    x2 = x.reshape(B, 32, 32)

    idx = np.zeros((2, 2, 8, 5), np.int32)        # (p, g, k, i) -> input row
    valid = np.zeros((2, 2, 8, 5, 1), np.float32)
    for p in range(2):
        for g in range(2):
            for k in range(8):
                for i in range(5):
                    r = 4 * k + 2 * g + p + i
                    if r < 32:
                        idx[p, g, k, i] = r
                        valid[p, g, k, i, 0] = 1.0

    rows = x2[:, jnp.asarray(idx), :]             # [B, 2, 2, 8, 5, 32]
    rows = rows * jnp.asarray(valid)[None]        # zero the k=7 padding rows
    rows = rows.transpose(1, 0, 2, 3, 4, 5)       # (p, b, g, k, i, v)
    rows = rows.reshape(2, nT, Bt, 2, 8, 160)
    rows = rows.transpose(1, 0, 2, 3, 4, 5)       # (tile, p, bt, g, k, i*32+v)
    return rows.reshape(nT, Bt * 32, 160).astype(jnp.bfloat16)


# --------------------------------- wrapper ----------------------------------

def lenet_forward(x_nchw, prep, batch_tile=1):
    B = x_nchw.shape[0]
    Bt = batch_tile
    assert B % Bt == 0, "batch must be divisible by batch_tile"
    nT = B // Bt
    rup = ((Bt + 7) // 8) * 8

    lhs1 = _conv1_im2row(x_nchw, Bt)
    weights = (prep["T1"], prep["b1"], prep["T2"], prep["b2"],
               prep["F1"], prep["fb1"], prep["F2"], prep["fb2"],
               prep["F3"], prep["fb3"])

    def resident(a):                    # full-array block, stays resident in VMEM
        return pl.BlockSpec(a.shape, lambda t, n=a.ndim: (0,) * n)

    flops = (2 * B * (32 * 160 * 256 + 16 * 640 * 256)
             + 2 * nT * rup * (640 * 128 + 128 * 128 + 128 * 128))
    bytes_accessed = (B * 32 * 160 * 2
                      + sum(int(np.prod(w.shape)) * w.dtype.itemsize for w in weights)
                      + nT * rup * 128 * 4)

    out = pl.pallas_call(
        _lenet_kernel,
        out_shape=jax.ShapeDtypeStruct((nT, rup, 128), jnp.float32),
        grid=(nT,),
        in_specs=[pl.BlockSpec((1, Bt * 32, 160), lambda t: (t, 0, 0))]
                 + [resident(w) for w in weights],
        out_specs=pl.BlockSpec((1, rup, 128), lambda t: (t, 0, 0)),
        compiler_params=pltpu.CompilerParams(
            dimension_semantics=("parallel",)),
        cost_estimate=pl.CostEstimate(flops=int(flops), transcendentals=0,
                                      bytes_accessed=int(bytes_accessed)),
    )(lhs1, *weights)

    # Logits are stored lane-dense ([nT, rup, 128]); keep B rows, 10 classes.
    return out[:, :Bt, :].reshape(B, 128)[:, :10]


# ----------------------------- pure-JAX reference ---------------------------

def _reference_forward(x, p):
    hi = lax.Precision.HIGHEST

    def conv(a, w, b):
        y = lax.conv_general_dilated(a, w, (1, 1), "VALID",
                                     dimension_numbers=("NCHW", "OIHW", "NCHW"),
                                     precision=hi)
        return y + b[None, :, None, None]

    def pool(a):
        return lax.reduce_window(a, -jnp.inf, lax.max,
                                 (1, 1, 2, 2), (1, 1, 2, 2), "VALID")

    a = pool(jax.nn.relu(conv(x, p["conv1_w"], p["conv1_b"])))
    a = pool(jax.nn.relu(conv(a, p["conv2_w"], p["conv2_b"])))
    a = a.reshape(a.shape[0], -1)
    a = jax.nn.relu(jnp.dot(a, p["fc1_w"].T, precision=hi) + p["fc1_b"])
    a = jax.nn.relu(jnp.dot(a, p["fc2_w"].T, precision=hi) + p["fc2_b"])
    return jnp.dot(a, p["fc3_w"].T, precision=hi) + p["fc3_b"]


# ----------------------------------- main ------------------------------------

if __name__ == "__main__":
    key = jax.random.PRNGKey(0)
    ks = jax.random.split(key, 11)

    def uniform(k, shape, fan_in):
        bound = 1.0 / float(np.sqrt(fan_in))
        return jax.random.uniform(k, shape, jnp.float32, -bound, bound)

    # PyTorch-layout parameters (weights [out, in, ...]), PyTorch-default init.
    params = {
        "conv1_w": uniform(ks[0], (6, 1, 5, 5), 25),
        "conv1_b": uniform(ks[1], (6,), 25),
        "conv2_w": uniform(ks[2], (16, 6, 5, 5), 150),
        "conv2_b": uniform(ks[3], (16,), 150),
        "fc1_w": uniform(ks[4], (120, 400), 400),
        "fc1_b": uniform(ks[5], (120,), 400),
        "fc2_w": uniform(ks[6], (84, 120), 120),
        "fc2_b": uniform(ks[7], (84,), 120),
        "fc3_w": uniform(ks[8], (10, 84), 84),
        "fc3_b": uniform(ks[9], (10,), 84),
    }
    x = jax.random.normal(ks[10], (2, 1, 32, 32), jnp.float32)

    prep = prepare_params(params)            # one-time host-side weight expansion
    fwd = jax.jit(lenet_forward, static_argnames=("batch_tile",))
    out = jax.block_until_ready(fwd(x, prep, batch_tile=1))
    assert out.shape == (2, 10) and out.dtype == jnp.float32

    ref = jax.block_until_ready(_reference_forward(x, params))
    err = float(jnp.max(jnp.abs(out - ref)))
    # bf16 MXU operands with f32 accumulation: observed error << 5e-2.
    assert err < 5e-2, f"mismatch vs reference: max abs err {err}"

    print("KERNEL_OK")
</pallas_src>

<mosaic_0001>
module attributes {stable_mosaic.version = 11 : i64} {
  func.func @_lenet_kernel(%arg0: i32, %arg1: memref<1x32x160xbf16, #tpu.memory_space<vmem>>, %arg2: memref<160x256xbf16, #tpu.memory_space<vmem>>, %arg3: memref<1x256xf32, #tpu.memory_space<vmem>>, %arg4: memref<640x256xbf16, #tpu.memory_space<vmem>>, %arg5: memref<1x256xf32, #tpu.memory_space<vmem>>, %arg6: memref<640x128xbf16, #tpu.memory_space<vmem>>, %arg7: memref<1x128xf32, #tpu.memory_space<vmem>>, %arg8: memref<128x128xbf16, #tpu.memory_space<vmem>>, %arg9: memref<1x128xf32, #tpu.memory_space<vmem>>, %arg10: memref<128x128xbf16, #tpu.memory_space<vmem>>, %arg11: memref<1x128xf32, #tpu.memory_space<vmem>>, %arg12: memref<1x8x128xf32, #tpu.memory_space<vmem>>) attributes {dimension_semantics = [#tpu.dimension_semantics<parallel>], iteration_bounds = array<i64: 2>, scalar_prefetch = 0 : i64, scratch_operands = 0 : i64, tpu.core_type = #tpu.core_type<tc>, window_params = [{transform_indices = @transform_0, window_bounds = array<i64: 1, 32, 160>}, {pipeline_mode = #tpu.pipeline_mode<synchronous>, transform_indices = @transform_1, window_bounds = array<i64: 160, 256>}, {pipeline_mode = #tpu.pipeline_mode<synchronous>, transform_indices = @transform_2, window_bounds = array<i64: 1, 256>}, {pipeline_mode = #tpu.pipeline_mode<synchronous>, transform_indices = @transform_3, window_bounds = array<i64: 640, 256>}, {pipeline_mode = #tpu.pipeline_mode<synchronous>, transform_indices = @transform_4, window_bounds = array<i64: 1, 256>}, {pipeline_mode = #tpu.pipeline_mode<synchronous>, transform_indices = @transform_5, window_bounds = array<i64: 640, 128>}, {pipeline_mode = #tpu.pipeline_mode<synchronous>, transform_indices = @transform_6, window_bounds = array<i64: 1, 128>}, {pipeline_mode = #tpu.pipeline_mode<synchronous>, transform_indices = @transform_7, window_bounds = array<i64: 128, 128>}, {pipeline_mode = #tpu.pipeline_mode<synchronous>, transform_indices = @transform_8, window_bounds = array<i64: 1, 128>}, {pipeline_mode = #tpu.pipeline_mode<synchronous>, transform_indices = @transform_9, window_bounds = array<i64: 128, 128>}, {pipeline_mode = #tpu.pipeline_mode<synchronous>, transform_indices = @transform_10, window_bounds = array<i64: 1, 128>}, {transform_indices = @transform_11, window_bounds = array<i64: 1, 8, 128>}]} {
    %c0 = arith.constant 0 : index
    %c0_0 = arith.constant 0 : index
    %c0_1 = arith.constant 0 : index
    %0 = vector.load %arg1[%c0, %c0_0, %c0_1] : memref<1x32x160xbf16, #tpu.memory_space<vmem>>, vector<1x32x160xbf16>
    %1 = vector.shape_cast %0 : vector<1x32x160xbf16> to vector<32x160xbf16>
    %c0_2 = arith.constant 0 : index
    %c0_3 = arith.constant 0 : index
    %2 = vector.load %arg2[%c0_2, %c0_3] : memref<160x256xbf16, #tpu.memory_space<vmem>>, vector<160x256xbf16>
    %cst = arith.constant dense<0.000000e+00> : vector<32x256xf32>
    %3 = tpu.matmul %1, %2, %cst {dimension_numbers = #tpu.dot_dimension_numbers<[1], [0], [0], [1], [0, 0, 1, 1], [], []>} : vector<32x160xbf16>, vector<160x256xbf16>, vector<32x256xf32> -> vector<32x256xf32>
    %c0_4 = arith.constant 0 : index
    %c0_5 = arith.constant 0 : index
    %4 = vector.load %arg3[%c0_4, %c0_5] : memref<1x256xf32, #tpu.memory_space<vmem>>, vector<1x256xf32>
    %5 = vector.broadcast %4 : vector<1x256xf32> to vector<32x256xf32>
    %6 = arith.addf %3, %5 : vector<32x256xf32>
    %cst_6 = arith.constant 0.000000e+00 : f32
    %7 = vector.broadcast %cst_6 : f32 to vector<32x256xf32>
    %8 = arith.maximumf %6, %7 : vector<32x256xf32>
    %9 = vector.extract_strided_slice %8 {offsets = [0, 0], sizes = [32, 128], strides = [1, 1]} : vector<32x256xf32> to vector<32x128xf32>
    %10 = vector.extract_strided_slice %8 {offsets = [0, 128], sizes = [32, 128], strides = [1, 1]} : vector<32x256xf32> to vector<32x128xf32>
    %11 = arith.maximumf %9, %10 : vector<32x128xf32>
    %12 = vector.extract_strided_slice %11 {offsets = [0, 0], sizes = [16, 128], strides = [1, 1]} : vector<32x128xf32> to vector<16x128xf32>
    %13 = vector.extract_strided_slice %11 {offsets = [16, 0], sizes = [16, 128], strides = [1, 1]} : vector<32x128xf32> to vector<16x128xf32>
    %14 = arith.maximumf %12, %13 : vector<16x128xf32>
    %15 = vector.shape_cast %14 : vector<16x128xf32> to vector<1x2x8x128xf32>
    %cst_7 = arith.constant 0.000000e+00 : f32
    %16 = vector.broadcast %cst_7 : f32 to vector<1x2x8x128xf32>
    %17 = tpu.concatenate %15, %16 in 2 : vector<1x2x8x128xf32>, vector<1x2x8x128xf32> -> vector<1x2x16x128xf32>
    %18 = vector.extract_strided_slice %17 {offsets = [0, 0, 0, 0], sizes = [1, 1, 8, 128], strides = [1, 1, 1, 1]} : vector<1x2x16x128xf32> to vector<1x1x8x128xf32>
    %19 = vector.shape_cast %18 : vector<1x1x8x128xf32> to vector<1x8x128xf32>
    %20 = vector.shape_cast %19 : vector<1x8x128xf32> to vector<8x128xf32>
    %21 = vector.extract_strided_slice %17 {offsets = [0, 1, 0, 0], sizes = [1, 1, 8, 128], strides = [1, 1, 1, 1]} : vector<1x2x16x128xf32> to vector<1x1x8x128xf32>
    %22 = vector.shape_cast %21 : vector<1x1x8x128xf32> to vector<1x8x128xf32>
    %23 = vector.shape_cast %22 : vector<1x8x128xf32> to vector<8x128xf32>
    %24 = tpu.concatenate %20, %23 in 0 : vector<8x128xf32>, vector<8x128xf32> -> vector<16x128xf32>
    %25 = vector.extract_strided_slice %17 {offsets = [0, 1, 0, 0], sizes = [1, 1, 8, 128], strides = [1, 1, 1, 1]} : vector<1x2x16x128xf32> to vector<1x1x8x128xf32>
    %26 = vector.shape_cast %25 : vector<1x1x8x128xf32> to vector<1x8x128xf32>
    %27 = vector.shape_cast %26 : vector<1x8x128xf32> to vector<8x128xf32>
    %28 = vector.extract_strided_slice %17 {offsets = [0, 0, 1, 0], sizes = [1, 1, 8, 128], strides = [1, 1, 1, 1]} : vector<1x2x16x128xf32> to vector<1x1x8x128xf32>
    %29 = vector.shape_cast %28 : vector<1x1x8x128xf32> to vector<1x8x128xf32>
    %30 = vector.shape_cast %29 : vector<1x8x128xf32> to vector<8x128xf32>
    %31 = tpu.concatenate %27, %30 in 0 : vector<8x128xf32>, vector<8x128xf32> -> vector<16x128xf32>
    %32 = vector.extract_strided_slice %17 {offsets = [0, 0, 1, 0], sizes = [1, 1, 8, 128], strides = [1, 1, 1, 1]} : vector<1x2x16x128xf32> to vector<1x1x8x128xf32>
    %33 = vector.shape_cast %32 : vector<1x1x8x128xf32> to vector<1x8x128xf32>
    %34 = vector.shape_cast %33 : vector<1x8x128xf32> to vector<8x128xf32>
    %35 = vector.extract_strided_slice %17 {offsets = [0, 1, 1, 0], sizes = [1, 1, 8, 128], strides = [1, 1, 1, 1]} : vector<1x2x16x128xf32> to vector<1x1x8x128xf32>
    %36 = vector.shape_cast %35 : vector<1x1x8x128xf32> to vector<1x8x128xf32>
    %37 = vector.shape_cast %36 : vector<1x8x128xf32> to vector<8x128xf32>
    %38 = tpu.concatenate %34, %37 in 0 : vector<8x128xf32>, vector<8x128xf32> -> vector<16x128xf32>
    %39 = vector.extract_strided_slice %17 {offsets = [0, 1, 1, 0], sizes = [1, 1, 8, 128], strides = [1, 1, 1, 1]} : vector<1x2x16x128xf32> to vector<1x1x8x128xf32>
    %40 = vector.shape_cast %39 : vector<1x1x8x128xf32> to vector<1x8x128xf32>
    %41 = vector.shape_cast %40 : vector<1x8x128xf32> to vector<8x128xf32>
    %42 = vector.extract_strided_slice %17 {offsets = [0, 0, 2, 0], sizes = [1, 1, 8, 128], strides = [1, 1, 1, 1]} : vector<1x2x16x128xf32> to vector<1x1x8x128xf32>
    %43 = vector.shape_cast %42 : vector<1x1x8x128xf32> to vector<1x8x128xf32>
    %44 = vector.shape_cast %43 : vector<1x8x128xf32> to vector<8x128xf32>
    %45 = tpu.concatenate %41, %44 in 0 : vector<8x128xf32>, vector<8x128xf32> -> vector<16x128xf32>
    %46 = vector.extract_strided_slice %17 {offsets = [0, 0, 2, 0], sizes = [1, 1, 8, 128], strides = [1, 1, 1, 1]} : vector<1x2x16x128xf32> to vector<1x1x8x128xf32>
    %47 = vector.shape_cast %46 : vector<1x1x8x128xf32> to vector<1x8x128xf32>
    %48 = vector.shape_cast %47 : vector<1x8x128xf32> to vector<8x128xf32>
    %49 = vector.extract_strided_slice %17 {offsets = [0, 1, 2, 0], sizes = [1, 1, 8, 128], strides = [1, 1, 1, 1]} : vector<1x2x16x128xf32> to vector<1x1x8x128xf32>
    %50 = vector.shape_cast %49 : vector<1x1x8x128xf32> to vector<1x8x128xf32>
    %51 = vector.shape_cast %50 : vector<1x8x128xf32> to vector<8x128xf32>
    %52 = tpu.concatenate %48, %51 in 0 : vector<8x128xf32>, vector<8x128xf32> -> vector<16x128xf32>
    %53 = tpu.concatenate %24, %31, %38, %45, %52 in 1 : vector<16x128xf32>, vector<16x128xf32>, vector<16x128xf32>, vector<16x128xf32>, vector<16x128xf32> -> vector<16x640xf32>
    %54 = arith.truncf %53 : vector<16x640xf32> to vector<16x640xbf16>
    %c0_8 = arith.constant 0 : index
    %c0_9 = arith.constant 0 : index
    %55 = vector.load %arg4[%c0_8, %c0_9] : memref<640x256xbf16, #tpu.memory_space<vmem>>, vector<640x256xbf16>
    %cst_10 = arith.constant dense<0.000000e+00> : vector<16x256xf32>
    %56 = tpu.matmul %54, %55, %cst_10 {dimension_numbers = #tpu.dot_dimension_numbers<[1], [0], [0], [1], [0, 0, 1, 1], [], []>} : vector<16x640xbf16>, vector<640x256xbf16>, vector<16x256xf32> -> vector<16x256xf32>
    %c0_11 = arith.constant 0 : index
    %c0_12 = arith.constant 0 : index
    %57 = vector.load %arg5[%c0_11, %c0_12] : memref<1x256xf32, #tpu.memory_space<vmem>>, vector<1x256xf32>
    %58 = vector.broadcast %57 : vector<1x256xf32> to vector<16x256xf32>
    %59 = arith.addf %56, %58 : vector<16x256xf32>
    %cst_13 = arith.constant 0.000000e+00 : f32
    %60 = vector.broadcast %cst_13 : f32 to vector<16x256xf32>
    %61 = arith.maximumf %59, %60 : vector<16x256xf32>
    %62 = vector.extract_strided_slice %61 {offsets = [0, 0], sizes = [16, 128], strides = [1, 1]} : vector<16x256xf32> to vector<16x128xf32>
    %63 = vector.extract_strided_slice %61 {offsets = [0, 128], sizes = [16, 128], strides = [1, 1]} : vector<16x256xf32> to vector<16x128xf32>
    %64 = arith.maximumf %62, %63 : vector<16x128xf32>
    %65 = vector.extract_strided_slice %64 {offsets = [0, 0], sizes = [8, 128], strides = [1, 1]} : vector<16x128xf32> to vector<8x128xf32>
    %66 = vector.extract_strided_slice %64 {offsets = [8, 0], sizes = [8, 128], strides = [1, 1]} : vector<16x128xf32> to vector<8x128xf32>
    %67 = arith.maximumf %65, %66 : vector<8x128xf32>
    %68 = vector.shape_cast %67 : vector<8x128xf32> to vector<1x8x128xf32>
    %69 = vector.extract_strided_slice %68 {offsets = [0, 0, 0], sizes = [1, 1, 128], strides = [1, 1, 1]} : vector<1x8x128xf32> to vector<1x1x128xf32>
    %70 = vector.shape_cast %69 : vector<1x1x128xf32> to vector<1x128xf32>
    %71 = vector.extract_strided_slice %68 {offsets = [0, 1, 0], sizes = [1, 1, 128], strides = [1, 1, 1]} : vector<1x8x128xf32> to vector<1x1x128xf32>
    %72 = vector.shape_cast %71 : vector<1x1x128xf32> to vector<1x128xf32>
    %73 = vector.extract_strided_slice %68 {offsets = [0, 2, 0], sizes = [1, 1, 128], strides = [1, 1, 1]} : vector<1x8x128xf32> to vector<1x1x128xf32>
    %74 = vector.shape_cast %73 : vector<1x1x128xf32> to vector<1x128xf32>
    %75 = vector.extract_strided_slice %68 {offsets = [0, 3, 0], sizes = [1, 1, 128], strides = [1, 1, 1]} : vector<1x8x128xf32> to vector<1x1x128xf32>
    %76 = vector.shape_cast %75 : vector<1x1x128xf32> to vector<1x128xf32>
    %77 = vector.extract_strided_slice %68 {offsets = [0, 4, 0], sizes = [1, 1, 128], strides = [1, 1, 1]} : vector<1x8x128xf32> to vector<1x1x128xf32>
    %78 = vector.shape_cast %77 : vector<1x1x128xf32> to vector<1x128xf32>
    %79 = tpu.concatenate %70, %72, %74, %76, %78 in 1 : vector<1x128xf32>, vector<1x128xf32>, vector<1x128xf32>, vector<1x128xf32>, vector<1x128xf32> -> vector<1x640xf32>
    %cst_14 = arith.constant 0.000000e+00 : f32
    %80 = vector.broadcast %cst_14 : f32 to vector<7x640xf32>
    %81 = tpu.concatenate %79, %80 in 0 : vector<1x640xf32>, vector<7x640xf32> -> vector<8x640xf32>
    %82 = arith.truncf %81 : vector<8x640xf32> to vector<8x640xbf16>
    %c0_15 = arith.constant 0 : index
    %c0_16 = arith.constant 0 : index
    %83 = vector.load %arg6[%c0_15, %c0_16] : memref<640x128xbf16, #tpu.memory_space<vmem>>, vector<640x128xbf16>
    %cst_17 = arith.constant dense<0.000000e+00> : vector<8x128xf32>
    %84 = tpu.matmul %82, %83, %cst_17 {dimension_numbers = #tpu.dot_dimension_numbers<[1], [0], [0], [1], [0, 0, 1, 1], [], []>} : vector<8x640xbf16>, vector<640x128xbf16>, vector<8x128xf32> -> vector<8x128xf32>
    %c0_18 = arith.constant 0 : index
    %c0_19 = arith.constant 0 : index
    %85 = vector.load %arg7[%c0_18, %c0_19] : memref<1x128xf32, #tpu.memory_space<vmem>>, vector<1x128xf32>
    %86 = vector.broadcast %85 : vector<1x128xf32> to vector<8x128xf32>
    %87 = arith.addf %84, %86 : vector<8x128xf32>
    %cst_20 = arith.constant 0.000000e+00 : f32
    %88 = vector.broadcast %cst_20 : f32 to vector<8x128xf32>
    %89 = arith.maximumf %87, %88 : vector<8x128xf32>
    %90 = arith.truncf %89 : vector<8x128xf32> to vector<8x128xbf16>
    %c0_21 = arith.constant 0 : index
    %c0_22 = arith.constant 0 : index
    %91 = vector.load %arg8[%c0_21, %c0_22] : memref<128x128xbf16, #tpu.memory_space<vmem>>, vector<128x128xbf16>
    %cst_23 = arith.constant dense<0.000000e+00> : vector<8x128xf32>
    %92 = tpu.matmul %90, %91, %cst_23 {dimension_numbers = #tpu.dot_dimension_numbers<[1], [0], [0], [1], [0, 0, 1, 1], [], []>} : vector<8x128xbf16>, vector<128x128xbf16>, vector<8x128xf32> -> vector<8x128xf32>
    %c0_24 = arith.constant 0 : index
    %c0_25 = arith.constant 0 : index
    %93 = vector.load %arg9[%c0_24, %c0_25] : memref<1x128xf32, #tpu.memory_space<vmem>>, vector<1x128xf32>
    %94 = vector.broadcast %93 : vector<1x128xf32> to vector<8x128xf32>
    %95 = arith.addf %92, %94 : vector<8x128xf32>
    %cst_26 = arith.constant 0.000000e+00 : f32
    %96 = vector.broadcast %cst_26 : f32 to vector<8x128xf32>
    %97 = arith.maximumf %95, %96 : vector<8x128xf32>
    %98 = arith.truncf %97 : vector<8x128xf32> to vector<8x128xbf16>
    %c0_27 = arith.constant 0 : index
    %c0_28 = arith.constant 0 : index
    %99 = vector.load %arg10[%c0_27, %c0_28] : memref<128x128xbf16, #tpu.memory_space<vmem>>, vector<128x128xbf16>
    %cst_29 = arith.constant dense<0.000000e+00> : vector<8x128xf32>
    %100 = tpu.matmul %98, %99, %cst_29 {dimension_numbers = #tpu.dot_dimension_numbers<[1], [0], [0], [1], [0, 0, 1, 1], [], []>} : vector<8x128xbf16>, vector<128x128xbf16>, vector<8x128xf32> -> vector<8x128xf32>
    %c0_30 = arith.constant 0 : index
    %c0_31 = arith.constant 0 : index
    %101 = vector.load %arg11[%c0_30, %c0_31] : memref<1x128xf32, #tpu.memory_space<vmem>>, vector<1x128xf32>
    %102 = vector.broadcast %101 : vector<1x128xf32> to vector<8x128xf32>
    %103 = arith.addf %100, %102 : vector<8x128xf32>
    %c0_32 = arith.constant 0 : index
    %c0_33 = arith.constant 0 : index
    %c0_34 = arith.constant 0 : index
    %104 = vector.load %arg12[%c0_32, %c0_33, %c0_34] : memref<1x8x128xf32, #tpu.memory_space<vmem>>, vector<1x8x128xf32>
    %105 = vector.shape_cast %104 : vector<1x8x128xf32> to vector<8x128xf32>
    %106 = vector.shape_cast %103 : vector<8x128xf32> to vector<1x8x128xf32>
    tpu.vector_store %arg12[%c0_32, %c0_33, %c0_34], %106 {strides = array<i32>} : memref<1x8x128xf32, #tpu.memory_space<vmem>>, vector<1x8x128xf32>,
    return
  }
  func.func @transform_0(%arg0: i32) -> (i32, i32, i32) {
    %c0_i32 = arith.constant 0 : i32
    %c0_i32_0 = arith.constant 0 : i32
    %c0_i32_1 = arith.constant 0 : i32
    return %arg0, %c0_i32, %c0_i32_0 : i32, i32, i32
  }
  func.func @transform_1(%arg0: i32) -> (i32, i32) {
    %c0_i32 = arith.constant 0 : i32
    %c0_i32_0 = arith.constant 0 : i32
    %c0_i32_1 = arith.constant 0 : i32
    return %c0_i32, %c0_i32_0 : i32, i32
  }
  func.func @transform_2(%arg0: i32) -> (i32, i32) {
    %c0_i32 = arith.constant 0 : i32
    %c0_i32_0 = arith.constant 0 : i32
    %c0_i32_1 = arith.constant 0 : i32
    return %c0_i32, %c0_i32_0 : i32, i32
  }
  func.func @transform_3(%arg0: i32) -> (i32, i32) {
    %c0_i32 = arith.constant 0 : i32
    %c0_i32_0 = arith.constant 0 : i32
    %c0_i32_1 = arith.constant 0 : i32
    return %c0_i32, %c0_i32_0 : i32, i32
  }
  func.func @transform_4(%arg0: i32) -> (i32, i32) {
    %c0_i32 = arith.constant 0 : i32
    %c0_i32_0 = arith.constant 0 : i32
    %c0_i32_1 = arith.constant 0 : i32
    return %c0_i32, %c0_i32_0 : i32, i32
  }
  func.func @transform_5(%arg0: i32) -> (i32, i32) {
    %c0_i32 = arith.constant 0 : i32
    %c0_i32_0 = arith.constant 0 : i32
    %c0_i32_1 = arith.constant 0 : i32
    return %c0_i32, %c0_i32_0 : i32, i32
  }
  func.func @transform_6(%arg0: i32) -> (i32, i32) {
    %c0_i32 = arith.constant 0 : i32
    %c0_i32_0 = arith.constant 0 : i32
    %c0_i32_1 = arith.constant 0 : i32
    return %c0_i32, %c0_i32_0 : i32, i32
  }
  func.func @transform_7(%arg0: i32) -> (i32, i32) {
    %c0_i32 = arith.constant 0 : i32
    %c0_i32_0 = arith.constant 0 : i32
    %c0_i32_1 = arith.constant 0 : i32
    return %c0_i32, %c0_i32_0 : i32, i32
  }
  func.func @transform_8(%arg0: i32) -> (i32, i32) {
    %c0_i32 = arith.constant 0 : i32
    %c0_i32_0 = arith.constant 0 : i32
    %c0_i32_1 = arith.constant 0 : i32
    return %c0_i32, %c0_i32_0 : i32, i32
  }
  func.func @transform_9(%arg0: i32) -> (i32, i32) {
    %c0_i32 = arith.constant 0 : i32
    %c0_i32_0 = arith.constant 0 : i32
    %c0_i32_1 = arith.constant 0 : i32
    return %c0_i32, %c0_i32_0 : i32, i32
  }
  func.func @transform_10(%arg0: i32) -> (i32, i32) {
    %c0_i32 = arith.constant 0 : i32
    %c0_i32_0 = arith.constant 0 : i32
    %c0_i32_1 = arith.constant 0 : i32
    return %c0_i32, %c0_i32_0 : i32, i32
  }
  func.func @transform_11(%arg0: i32) -> (i32, i32, i32) {
    %c0_i32 = arith.constant 0 : i32
    %c0_i32_0 = arith.constant 0 : i32
    %c0_i32_1 = arith.constant 0 : i32
    return %arg0, %c0_i32, %c0_i32_0 : i32, i32, i32
  }
}

</mosaic_0001>

<llo_original>
// kernel: lenet_forward.1
$region0: #{lenet_forward.1}
  #allocation0 [shape = 'u32[]', space=smem, size = 0x4, offset = 0x4, fixed_abs, tag = 'smem constant byte address 0x4 - core index']
  #allocation1 [shape = 'u32[144,128]{1,0:T(1,128)}', space=vmem, size = 0x12000, scoped, tag = 'internal scratch']
  %s0 = inlined_call_operand.vmem [shape: bf16[2,32,160], index: 0, kind: input, shape index: {}]
  %s1 = inlined_call_operand.vmem [shape: bf16[160,256], index: 1, kind: input, shape index: {}]
  %s2 = inlined_call_operand.vmem [shape: f32[1,256], index: 2, kind: input, shape index: {}]
  %s3 = inlined_call_operand.vmem [shape: bf16[640,256], index: 3, kind: input, shape index: {}]
  %s4 = inlined_call_operand.vmem [shape: f32[1,256], index: 4, kind: input, shape index: {}]
  %s5 = inlined_call_operand.vmem [shape: bf16[640,128], index: 5, kind: input, shape index: {}]
  %s6 = inlined_call_operand.vmem [shape: f32[1,128], index: 6, kind: input, shape index: {}]
  %s7 = inlined_call_operand.vmem [shape: bf16[128,128], index: 7, kind: input, shape index: {}]
  %s8 = inlined_call_operand.vmem [shape: f32[1,128], index: 8, kind: input, shape index: {}]
  %s9 = inlined_call_operand.vmem [shape: bf16[128,128], index: 9, kind: input, shape index: {}]
  %s10 = inlined_call_operand.vmem [shape: f32[1,128], index: 10, kind: input, shape index: {}]
  %s11 = inlined_call_operand.vmem [shape: f32[2,8,128], index: 11, kind: output, shape index: {}]
  %s12 = sld [smem:[#allocation0]]
  $region77: #{lenet_forward.1} parent=0
    _
  %s14 = ssub.s32 1, %s12
  %s15 = scalar_select 0, %s14, %s12
  loop: start=0, step=1, limit=4
  $region2: #{lenet_forward.1} parent=0 // loop_pre_header
    _
  $region3: #{lenet_forward.1} parent=0 // loop_header
    %s17 = sphi 0, %s21
    %p18 = scmp.ge.s32.totalorder %s17, 4
    %s27 = sphi 0, %s29
    %s30 = sphi 0, %s27
    %s31 = sphi 0, %s30
    %s47 = sphi 0, %s31
    %s51 = sphi 0, %s51
    %s53 = sphi 0, %s51
    %s54 = sphi 0, %s53
    %s68 = sphi 0, %s54
    %s72 = sphi 0, %s72
    %s74 = sphi 0, %s72
    %s75 = sphi 0, %s74
    %s89 = sphi 0, %s75
    %s93 = sphi 0, %s93
    %s95 = sphi 0, %s93
    %s96 = sphi 0, %s95
    %s110 = sphi 0, %s96
    %s114 = sphi 0, %s114
    %s116 = sphi 0, %s114
    %s117 = sphi 0, %s116
    %s131 = sphi 0, %s117
    %s135 = sphi 0, %s135
    %s137 = sphi 0, %s135
    %s138 = sphi 0, %s137
    %s152 = sphi 0, %s138
    %s156 = sphi 0, %s156
    %s158 = sphi 0, %s156
    %s159 = sphi 0, %s158
    %s173 = sphi 0, %s159
    %s177 = sphi 0, %s177
    %s179 = sphi 0, %s177
    %s180 = sphi 0, %s179
    %s194 = sphi 0, %s180
    %s198 = sphi 0, %s198
    %s200 = sphi 0, %s198
    %s201 = sphi 0, %s200
    %s215 = sphi 0, %s201
    %s219 = sphi 0, %s219
    %s221 = sphi 0, %s219
    %s222 = sphi 0, %s221
    %s236 = sphi 0, %s222
    %s240 = sphi 0, %s240
    %s242 = sphi 0, %s240
    %s243 = sphi 0, %s242
    %s257 = sphi 0, %s243
    %s263 = sphi 0, %s265
    %s266 = sphi 0, %s263
    %s267 = sphi 0, %s266
    %s283 = sphi 0, %s267
  $region4: #{lenet_forward.1} parent=0 // loop_header_branch
    %20 = sbr.rel (%p18) target = $region8
  $region5: #{lenet_forward.1} parent=0 // loop_body
    %s22 = ssub.s32 %s17, 1
    %s23 = ssub.s32 %s17, 2
    %s24 = sadd.s32 %s17, 1
    %s25 = ssub.s32 %s17, %s24
    %p26 = scmp.eq.s32.totalorder %s25, 0
    %s28 = sadd.s32 %s27, 1
    %s29 = scalar_select %p26, %s27, %s28
    %p32 = pneg %p26
    %p33 = scmp.eq.s32.totalorder %s17, 1
    %p34 = por %p32, %p33
    %p35 = scmp.ne.s32.totalorder %s27, %s30
    %p36 = scmp.eq.s32.totalorder %s17, 0
    %p37 = por %p35, %p36
    %p38 = scmp.ne.s32.totalorder %s27, %s30
    %p39 = scmp.eq.s32.totalorder %s22, 1
    %p40 = por %p38, %p39
    %p41 = scmp.ne.s32.totalorder %s30, %s31
    %p42 = scmp.eq.s32.totalorder %s22, 0
    %p43 = por %p41, %p42
    %p44 = scmp.ne.s32.totalorder %s30, %s31
    %p45 = scmp.eq.s32.totalorder %s23, 1
    %p46 = por %p44, %p45
    %p48 = scmp.ne.s32.totalorder %s31, %s47
    %p49 = scmp.eq.s32.totalorder %s23, 0
    %p50 = por %p48, %p49
    %s52 = sadd.s32 %s51, 1
    %p55 = scmp.eq.s32.totalorder %s17, 1
    %p56 = scmp.ne.s32.totalorder %s51, %s53
    %p57 = scmp.eq.s32.totalorder %s17, 0
    %p58 = por %p56, %p57
    %p59 = scmp.ne.s32.totalorder %s51, %s53
    %p60 = scmp.eq.s32.totalorder %s22, 1
    %p61 = por %p59, %p60
    %p62 = scmp.ne.s32.totalorder %s53, %s54
    %p63 = scmp.eq.s32.totalorder %s22, 0
    %p64 = por %p62, %p63
    %p65 = scmp.ne.s32.totalorder %s53, %s54
    %p66 = scmp.eq.s32.totalorder %s23, 1
    %p67 = por %p65, %p66
    %p69 = scmp.ne.s32.totalorder %s54, %s68
    %p70 = scmp.eq.s32.totalorder %s23, 0
    %p71 = por %p69, %p70
    %s73 = sadd.s32 %s72, 1
    %p76 = scmp.eq.s32.totalorder %s17, 1
    %p77 = scmp.ne.s32.totalorder %s72, %s74
    %p78 = scmp.eq.s32.totalorder %s17, 0
    %p79 = por %p77, %p78
    %p80 = scmp.ne.s32.totalorder %s72, %s74
    %p81 = scmp.eq.s32.totalorder %s22, 1
    %p82 = por %p80, %p81
    %p83 = scmp.ne.s32.totalorder %s74, %s75
    %p84 = scmp.eq.s32.totalorder %s22, 0
    %p85 = por %p83, %p84
    %p86 = scmp.ne.s32.totalorder %s74, %s75
    %p87 = scmp.eq.s32.totalorder %s23, 1
    %p88 = por %p86, %p87
    %p90 = scmp.ne.s32.totalorder %s75, %s89
    %p91 = scmp.eq.s32.totalorder %s23, 0
    %p92 = por %p90, %p91
    %s94 = sadd.s32 %s93, 1
    %p97 = scmp.eq.s32.totalorder %s17, 1
    %p98 = scmp.ne.s32.totalorder %s93, %s95
    %p99 = scmp.eq.s32.totalorder %s17, 0
    %p100 = por %p98, %p99
    %p101 = scmp.ne.s32.totalorder %s93, %s95
    %p102 = scmp.eq.s32.totalorder %s22, 1
    %p103 = por %p101, %p102
    %p104 = scmp.ne.s32.totalorder %s95, %s96
    %p105 = scmp.eq.s32.totalorder %s22, 0
    %p106 = por %p104, %p105
    %p107 = scmp.ne.s32.totalorder %s95, %s96
    %p108 = scmp.eq.s32.totalorder %s23, 1
    %p109 = por %p107, %p108
    %p111 = scmp.ne.s32.totalorder %s96, %s110
    %p112 = scmp.eq.s32.totalorder %s23, 0
    %p113 = por %p111, %p112
    %s115 = sadd.s32 %s114, 1
    %p118 = scmp.eq.s32.totalorder %s17, 1
    %p119 = scmp.ne.s32.totalorder %s114, %s116
    %p120 = scmp.eq.s32.totalorder %s17, 0
    %p121 = por %p119, %p120
    %p122 = scmp.ne.s32.totalorder %s114, %s116
    %p123 = scmp.eq.s32.totalorder %s22, 1
    %p124 = por %p122, %p123
    %p125 = scmp.ne.s32.totalorder %s116, %s117
    %p126 = scmp.eq.s32.totalorder %s22, 0
    %p127 = por %p125, %p126
    %p128 = scmp.ne.s32.totalorder %s116, %s117
    %p129 = scmp.eq.s32.totalorder %s23, 1
    %p130 = por %p128, %p129
    %p132 = scmp.ne.s32.totalorder %s117, %s131
    %p133 = scmp.eq.s32.totalorder %s23, 0
    %p134 = por %p132, %p133
    %s136 = sadd.s32 %s135, 1
    %p139 = scmp.eq.s32.totalorder %s17, 1
    %p140 = scmp.ne.s32.totalorder %s135, %s137
    %p141 = scmp.eq.s32.totalorder %s17, 0
    %p142 = por %p140, %p141
    %p143 = scmp.ne.s32.totalorder %s135, %s137
    %p144 = scmp.eq.s32.totalorder %s22, 1
    %p145 = por %p143, %p144
    %p146 = scmp.ne.s32.totalorder %s137, %s138
    %p147 = scmp.eq.s32.totalorder %s22, 0
    %p148 = por %p146, %p147
    %p149 = scmp.ne.s32.totalorder %s137, %s138
    %p150 = scmp.eq.s32.totalorder %s23, 1
    %p151 = por %p149, %p150
    %p153 = scmp.ne.s32.totalorder %s138, %s152
    %p154 = scmp.eq.s32.totalorder %s23, 0
    %p155 = por %p153, %p154
    %s157 = sadd.s32 %s156, 1
    %p160 = scmp.eq.s32.totalorder %s17, 1
    %p161 = scmp.ne.s32.totalorder %s156, %s158
    %p162 = scmp.eq.s32.totalorder %s17, 0
    %p163 = por %p161, %p162
    %p164 = scmp.ne.s32.totalorder %s156, %s158
    %p165 = scmp.eq.s32.totalorder %s22, 1
    %p166 = por %p164, %p165
    %p167 = scmp.ne.s32.totalorder %s158, %s159
    %p168 = scmp.eq.s32.totalorder %s22, 0
    %p169 = por %p167, %p168
    %p170 = scmp.ne.s32.totalorder %s158, %s159
    %p171 = scmp.eq.s32.totalorder %s23, 1
    %p172 = por %p170, %p171
    %p174 = scmp.ne.s32.totalorder %s159, %s173
    %p175 = scmp.eq.s32.totalorder %s23, 0
    %p176 = por %p174, %p175
    %s178 = sadd.s32 %s177, 1
    %p181 = scmp.eq.s32.totalorder %s17, 1
    %p182 = scmp.ne.s32.totalorder %s177, %s179
    %p183 = scmp.eq.s32.totalorder %s17, 0
    %p184 = por %p182, %p183
    %p185 = scmp.ne.s32.totalorder %s177, %s179
    %p186 = scmp.eq.s32.totalorder %s22, 1
    %p187 = por %p185, %p186
    %p188 = scmp.ne.s32.totalorder %s179, %s180
    %p189 = scmp.eq.s32.totalorder %s22, 0
    %p190 = por %p188, %p189
    %p191 = scmp.ne.s32.totalorder %s179, %s180
    %p192 = scmp.eq.s32.totalorder %s23, 1
    %p193 = por %p191, %p192
    %p195 = scmp.ne.s32.totalorder %s180, %s194
    %p196 = scmp.eq.s32.totalorder %s23, 0
    %p197 = por %p195, %p196
    %s199 = sadd.s32 %s198, 1
    %p202 = scmp.eq.s32.totalorder %s17, 1
    %p203 = scmp.ne.s32.totalorder %s198, %s200
    %p204 = scmp.eq.s32.totalorder %s17, 0
    %p205 = por %p203, %p204
    %p206 = scmp.ne.s32.totalorder %s198, %s200
    %p207 = scmp.eq.s32.totalorder %s22, 1
    %p208 = por %p206, %p207
    %p209 = scmp.ne.s32.totalorder %s200, %s201
    %p210 = scmp.eq.s32.totalorder %s22, 0
    %p211 = por %p209, %p210
    %p212 = scmp.ne.s32.totalorder %s200, %s201
    %p213 = scmp.eq.s32.totalorder %s23, 1
    %p214 = por %p212, %p213
    %p216 = scmp.ne.s32.totalorder %s201, %s215
    %p217 = scmp.eq.s32.totalorder %s23, 0
    %p218 = por %p216, %p217
    %s220 = sadd.s32 %s219, 1
    %p223 = scmp.eq.s32.totalorder %s17, 1
    %p224 = scmp.ne.s32.totalorder %s219, %s221
    %p225 = scmp.eq.s32.totalorder %s17, 0
    %p226 = por %p224, %p225
    %p227 = scmp.ne.s32.totalorder %s219, %s221
    %p228 = scmp.eq.s32.totalorder %s22, 1
    %p229 = por %p227, %p228
    %p230 = scmp.ne.s32.totalorder %s221, %s222
    %p231 = scmp.eq.s32.totalorder %s22, 0
    %p232 = por %p230, %p231
    %p233 = scmp.ne.s32.totalorder %s221, %s222
    %p234 = scmp.eq.s32.totalorder %s23, 1
    %p235 = por %p233, %p234
    %p237 = scmp.ne.s32.totalorder %s222, %s236
    %p238 = scmp.eq.s32.totalorder %s23, 0
    %p239 = por %p237, %p238
    %s241 = sadd.s32 %s240, 1
    %p244 = scmp.eq.s32.totalorder %s17, 1
    %p245 = scmp.ne.s32.totalorder %s240, %s242
    %p246 = scmp.eq.s32.totalorder %s17, 0
    %p247 = por %p245, %p246
    %p248 = scmp.ne.s32.totalorder %s240, %s242
    %p249 = scmp.eq.s32.totalorder %s22, 1
    %p250 = por %p248, %p249
    %p251 = scmp.ne.s32.totalorder %s242, %s243
    %p252 = scmp.eq.s32.totalorder %s22, 0
    %p253 = por %p251, %p252
    %p254 = scmp.ne.s32.totalorder %s242, %s243
    %p255 = scmp.eq.s32.totalorder %s23, 1
    %p256 = por %p254, %p255
    %p258 = scmp.ne.s32.totalorder %s243, %s257
    %p259 = scmp.eq.s32.totalorder %s23, 0
    %p260 = por %p258, %p259
    %s261 = ssub.s32 %s17, %s24
    %p262 = scmp.eq.s32.totalorder %s261, 0
    %s264 = sadd.s32 %s263, 1
    %s265 = scalar_select %p262, %s263, %s264
    %p268 = pneg %p262
    %p269 = scmp.eq.s32.totalorder %s17, 1
    %p270 = por %p268, %p269
    %p271 = scmp.ne.s32.totalorder %s263, %s266
    %p272 = scmp.eq.s32.totalorder %s17, 0
    %p273 = por %p271, %p272
    %p274 = scmp.ne.s32.totalorder %s263, %s266
    %p275 = scmp.eq.s32.totalorder %s22, 1
    %p276 = por %p274, %p275
    %p277 = scmp.ne.s32.totalorder %s266, %s267
    %p278 = scmp.eq.s32.totalorder %s22, 0
    %p279 = por %p277, %p278
    %p280 = scmp.ne.s32.totalorder %s266, %s267
    %p281 = scmp.eq.s32.totalorder %s23, 1
    %p282 = por %p280, %p281
    %p284 = scmp.ne.s32.totalorder %s267, %s283
    %p285 = scmp.eq.s32.totalorder %s23, 0
    %p286 = por %p284, %p285
    %p287 = scmp.le.s32.totalorder 1, %s17
    %p288 = scmp.lt.s32.totalorder %s17, 3
    %p289 = pnand %p287, %p288
    %p290 = pneg %p289
    // Predicated region
    $region9: #{lenet_forward.1} parent=5 // pred_check
      _
    $region10: #{lenet_forward.1} parent=5 // pred_check_branch
      %292 = sbr.rel (%p289) target = $region12
    $region11: #{lenet_forward.1} parent=5 // pred_region
      %s293 = ssub.s32 %s17, 1
      // Predicated region
      $region13: #{lenet_forward.1} parent=11 // pred_check
        %p294 = pneg %p64
      $region14: #{lenet_forward.1} parent=11 // pred_check_branch
        %296 = sbr.rel (%p294) target = $region16
      $region15: #{lenet_forward.1} parent=11 // pred_region
        _
      $region16: #{lenet_forward.1} parent=11 // pred_fallthru
        _
      // Predicated region
      $region17: #{lenet_forward.1} parent=11 // pred_check
        %p297 = pneg %p85
      $region18: #{lenet_forward.1} parent=11 // pred_check_branch
        %299 = sbr.rel (%p297) target = $region20
      $region19: #{lenet_forward.1} parent=11 // pred_region
        _
      $region20: #{lenet_forward.1} parent=11 // pred_fallthru
        _
      // Predicated region
      $region21: #{lenet_forward.1} parent=11 // pred_check
        %p300 = pneg %p106
      $region22: #{lenet_forward.1} parent=11 // pred_check_branch
        %302 = sbr.rel (%p300) target = $region24
      $region23: #{lenet_forward.1} parent=11 // pred_region
        _
      $region24: #{lenet_forward.1} parent=11 // pred_fallthru
        _
      // Predicated region
      $region25: #{lenet_forward.1} parent=11 // pred_check
        %p303 = pneg %p127
      $region26: #{lenet_forward.1} parent=11 // pred_check_branch
        %305 = sbr.rel (%p303) target = $region28
      $region27: #{lenet_forward.1} parent=11 // pred_region
        _
      $region28: #{lenet_forward.1} parent=11 // pred_fallthru
        _
      // Predicated region
      $region29: #{lenet_forward.1} parent=11 // pred_check
        %p306 = pneg %p148
      $region30: #{lenet_forward.1} parent=11 // pred_check_branch
        %308 = sbr.rel (%p306) target = $region32
      $region31: #{lenet_forward.1} parent=11 // pred_region
        _
      $region32: #{lenet_forward.1} parent=11 // pred_fallthru
        _
      // Predicated region
      $region33: #{lenet_forward.1} parent=11 // pred_check
        %p309 = pneg %p169
      $region34: #{lenet_forward.1} parent=11 // pred_check_branch
        %311 = sbr.rel (%p309) target = $region36
      $region35: #{lenet_forward.1} parent=11 // pred_region
        _
      $region36: #{lenet_forward.1} parent=11 // pred_fallthru
        _
      // Predicated region
      $region37: #{lenet_forward.1} parent=11 // pred_check
        %p312 = pneg %p190
      $region38: #{lenet_forward.1} parent=11 // pred_check_branch
        %314 = sbr.rel (%p312) target = $region40
      $region39: #{lenet_forward.1} parent=11 // pred_region
        _
      $region40: #{lenet_forward.1} parent=11 // pred_fallthru
        _
      // Predicated region
      $region41: #{lenet_forward.1} parent=11 // pred_check
        %p315 = pneg %p211
      $region42: #{lenet_forward.1} parent=11 // pred_check_branch
        %317 = sbr.rel (%p315) target = $region44
      $region43: #{lenet_forward.1} parent=11 // pred_region
        _
      $region44: #{lenet_forward.1} parent=11 // pred_fallthru
        _
      // Predicated region
      $region45: #{lenet_forward.1} parent=11 // pred_check
        %p318 = pneg %p232
      $region46: #{lenet_forward.1} parent=11 // pred_check_branch
        %320 = sbr.rel (%p318) target = $region48
      $region47: #{lenet_forward.1} parent=11 // pred_region
        _
      $region48: #{lenet_forward.1} parent=11 // pred_fallthru
        _
      // Predicated region
      $region49: #{lenet_forward.1} parent=11 // pred_check
        %p321 = pneg %p253
      $region50: #{lenet_forward.1} parent=11 // pred_check_branch
        %323 = sbr.rel (%p321) target = $region52
      $region51: #{lenet_forward.1} parent=11 // pred_region
        _
      $region52: #{lenet_forward.1} parent=11 // pred_fallthru
        _
    $region12: #{lenet_forward.1} parent=5 // pred_fallthru
      _
    %p324 = scmp.lt.s32.totalorder %s17, 2
    // Predicated region
    $region53: #{lenet_forward.1} parent=5 // pred_check
      %p325 = pneg %p324
    $region54: #{lenet_forward.1} parent=5 // pred_check_branch
      %327 = sbr.rel (%p325) target = $region56
    $region55: #{lenet_forward.1} parent=5 // pred_region
      // Predicated region
      $region57: #{lenet_forward.1} parent=55 // pred_check
        %p328 = pneg %p37
      $region58: #{lenet_forward.1} parent=55 // pred_check_branch
        %330 = sbr.rel (%p328) target = $region60
      $region59: #{lenet_forward.1} parent=55 // pred_region
        %p331 = scmp.lt.s32.totalorder %s17, 1
        %s332 = scalar_select %p331, %s17, 1
        %s333 = smul.addr %s332, 8
        %s334 = smul.addr %s333, 4
        %s335 = scalar_lea.vmem %s0, %s334
      $region60: #{lenet_forward.1} parent=55 // pred_fallthru
        _
    $region56: #{lenet_forward.1} parent=5 // pred_fallthru
      _
    %p336 = scmp.le.s32.totalorder 1, %s17
    %p337 = scmp.lt.s32.totalorder %s17, 3
    %p338 = pnand %p336, %p337
    %p339 = pneg %p338
    // Predicated region
    $region61: #{lenet_forward.1} parent=5 // pred_check
      _
    $region62: #{lenet_forward.1} parent=5 // pred_check_branch
      %341 = sbr.rel (%p338) target = $region64
    $region63: #{lenet_forward.1} parent=5 // pred_region
      %s342 = ssub.s32 %s17, 1
      %p343 = scmp.lt.s32.totalorder %s22, 1
      %s344 = scalar_select %p343, %s22, 1
      %s345 = smul.addr %s344, 8
      %s346 = smul.addr %s345, 4
      %s347 = scalar_lea.vmem %s0, %s346
      %p348 = pneg %p43
      %p349 = pneg %p40
      %p350 = pneg %p64
      %p351 = pneg %p61
      %p352 = pneg %p85
      %p353 = pneg %p82
      %p354 = pneg %p106
      %p355 = pneg %p103
      %p356 = pneg %p127
      %p357 = pneg %p124
      %p358 = pneg %p148
      %p359 = pneg %p145
      %p360 = pneg %p169
      %p361 = pneg %p166
      %p362 = pneg %p190
      %p363 = pneg %p187
      %p364 = pneg %p211
      %p365 = pneg %p208
      %p366 = pneg %p232
      %p367 = pneg %p229
      %p368 = pneg %p253
      %p369 = pneg %p250
      %p370 = pneg %p279
      %p371 = pneg %p276
      %p372 = scmp.lt.s32.totalorder %s22, 1
      %s373 = scalar_select %p372, %s22, 1
      %s374 = smul.addr %s373, 8
      %s375 = scalar_lea.vmem %s11, %s374
      %p376 = scmp.lt.s32.totalorder %s22, 1
      %s377 = scalar_select %p376, %s22, 1
      %s378 = smul.addr %s377, 8
      %s379 = smul.addr %s378, 4
      %s380 = scalar_lea.vmem %s0, %s379
      %p381 = scmp.lt.s32.totalorder %s22, 1
      %s382 = scalar_select %p381, %s22, 1
      %s383 = smul.addr %s382, 8
      %s384 = scalar_lea.vmem %s11, %s383
      %v386 = vld [vmem:[%s380] sm:$0xff]
      %v387 = vld [vmem:[%s380 + $0x8] sm:$0xff]
      %v388 = vld [vmem:[%s380 + $0x10] sm:$0xff]
      %v389 = vld [vmem:[%s380 + $0x18] sm:$0xff]
      %v390 = vld [vmem:[%s1] sm:$0xff]
      %v391 = vld [vmem:[%s1 + $0x8] sm:$0xff]
      %v392 = vld [vmem:[%s1 + $0x10] sm:$0xff]
      %v393 = vld [vmem:[%s1 + $0x18] sm:$0xff]
      %v394 = vld [vmem:[%s1 + $0x20] sm:$0xff]
      %v395 = vld [vmem:[%s1 + $0x28] sm:$0xff]
      %v396 = vld [vmem:[%s1 + $0x30] sm:$0xff]
      %v397 = vld [vmem:[%s1 + $0x38] sm:$0xff]
      %v398 = vld [vmem:[%s1 + $0x40] sm:$0xff]
      %v399 = vld [vmem:[%s1 + $0x48] sm:$0xff]
      %v400 = vld [vmem:[%s1 + $0x50] sm:$0xff]
      %v401 = vld [vmem:[%s1 + $0x58] sm:$0xff]
      %v402 = vld [vmem:[%s1 + $0x60] sm:$0xff]
      %v403 = vld [vmem:[%s1 + $0x68] sm:$0xff]
      %v404 = vld [vmem:[%s1 + $0x70] sm:$0xff]
      %v405 = vld [vmem:[%s1 + $0x78] sm:$0xff]
      %v406 = vld [vmem:[%s1 + $0x80] sm:$0xff]
      %v407 = vld [vmem:[%s1 + $0x88] sm:$0xff]
      %v408 = vld [vmem:[%s1 + $0x90] sm:$0xff]
      %v409 = vld [vmem:[%s1 + $0x98] sm:$0xff]
      %v410 = vld [vmem:[%s2] sm:$0x3]
      %v412 = vlaneseq
      %v413 = vshrl.u32 %v412, 7
      %v414 = vsub.s32 0, %v413
      %v415 = vrot.slane %v410, %v414
      %v416 = vlaneseq
      %v417 = vshrl.u32 %v416, 7
      %v418 = vsub.s32 1, %v417
      %v419 = vrot.slane %v410, %v418
      %v426 = vunpack.c.l.b16 %v386
      %v427 = vunpack.c.h.b16 %v386
      %v428 = vunpack.c.l.b16 %v387
      %v429 = vunpack.c.h.b16 %v387
      %v430 = vunpack.c.l.b16 %v388
      %v431 = vunpack.c.h.b16 %v388
      %v432 = vunpack.c.l.b16 %v389
      %v433 = vunpack.c.h.b16 %v389
      %v434 = vpack.c.b16 %v428, %v426
      %v435 = vpack.c.b16 %v429, %v427
      %v436 = vpack.c.b16 %v432, %v430
      %v437 = vpack.c.b16 %v433, %v431
      %v460 = vunpack.c.l.b16 %v390
      %v461 = vunpack.c.h.b16 %v390
      %v462 = vunpack.c.l.b16 %v391
      %v463 = vunpack.c.h.b16 %v391
      %v464 = vunpack.c.l.b16 %v392
      %v465 = vunpack.c.h.b16 %v392
      %v466 = vunpack.c.l.b16 %v393
      %v467 = vunpack.c.h.b16 %v393
      %v468 = vunpack.c.l.b16 %v394
      %v469 = vunpack.c.h.b16 %v394
      %v470 = vunpack.c.l.b16 %v395
      %v471 = vunpack.c.h.b16 %v395
      %v472 = vunpack.c.l.b16 %v396
      %v473 = vunpack.c.h.b16 %v396
      %v474 = vunpack.c.l.b16 %v397
      %v475 = vunpack.c.h.b16 %v397
      %v476 = vunpack.c.l.b16 %v398
      %v477 = vunpack.c.h.b16 %v398
      %v478 = vunpack.c.l.b16 %v399
      %v479 = vunpack.c.h.b16 %v399
      %v480 = vunpack.c.l.b16 %v400
      %v481 = vunpack.c.h.b16 %v400
      %v482 = vunpack.c.l.b16 %v401
      %v483 = vunpack.c.h.b16 %v401
      %v484 = vunpack.c.l.b16 %v402
      %v485 = vunpack.c.h.b16 %v402
      %v486 = vunpack.c.l.b16 %v403
      %v487 = vunpack.c.h.b16 %v403
      %v488 = vunpack.c.l.b16 %v404
      %v489 = vunpack.c.h.b16 %v404
      %v490 = vunpack.c.l.b16 %v405
      %v491 = vunpack.c.h.b16 %v405
      %v492 = vunpack.c.l.b16 %v406
      %v493 = vunpack.c.h.b16 %v406
      %v494 = vunpack.c.l.b16 %v407
      %v495 = vunpack.c.h.b16 %v407
      %v496 = vunpack.c.l.b16 %v408
      %v497 = vunpack.c.h.b16 %v408
      %v498 = vunpack.c.l.b16 %v409
      %v499 = vunpack.c.h.b16 %v409
      %v500 = vpack.c.b16 %v462, %v460
      %v501 = vpack.c.b16 %v463, %v461
      %v502 = vpack.c.b16 %v466, %v464
      %v503 = vpack.c.b16 %v467, %v465
      %v504 = vpack.c.b16 %v470, %v468
      %v505 = vpack.c.b16 %v471, %v469
      %v506 = vpack.c.b16 %v474, %v472
      %v507 = vpack.c.b16 %v475, %v473
      %v508 = vpack.c.b16 %v478, %v476
      %v509 = vpack.c.b16 %v479, %v477
      %v510 = vpack.c.b16 %v482, %v480
      %v511 = vpack.c.b16 %v483, %v481
      %v512 = vpack.c.b16 %v486, %v484
      %v513 = vpack.c.b16 %v487, %v485
      %v514 = vpack.c.b16 %v490, %v488
      %v515 = vpack.c.b16 %v491, %v489
      %v516 = vpack.c.b16 %v494, %v492
      %v517 = vpack.c.b16 %v495, %v493
      %v518 = vpack.c.b16 %v498, %v496
      %v519 = vpack.c.b16 %v499, %v497
      %vm540 = vcmask 261120
      %v542 = vsel %vm540, %v435, 0
      %v545 = vsel %vm540, %v437, 0
      %547 = vmatprep.subr.bf16.mxu0 %v501
      %548 = vmatpush1.bf16.msra.mxu0 %v500
      %549 = vmatprep.subr.bf16.mxu0 %v503
      %550 = vmatpush1.bf16.msra.mxu0 %v502
      %551 = vmatprep.subr.bf16.mxu0 %v505
      %552 = vmatpush1.bf16.msra.mxu0 %v504
      %553 = vmatprep.subr.bf16.mxu0 %v507
      %554 = vmatpush1.bf16.msra.mxu0 %v506
      %555 = vmatprep.subr.bf16.mxu0 %v509
      %556 = vmatpush1.bf16.msra.mxu0 %v508
      %557 = vmatprep.subr.bf16.mxu0 %v511
      %558 = vmatpush1.bf16.msra.mxu0 %v510
      %559 = vmatprep.subr.bf16.mxu0 %v513
      %560 = vmatpush1.bf16.msra.mxu0 %v512
      %561 = vmatprep.subr.bf16.mxu0 %v515
      %562 = vmatpush1.bf16.msra.mxu0 %v514
      %563 = vmatprep.subr.bf16.mxu0 %v517
      %564 = vmatpush1.bf16.msra.mxu0 %v516
      %565 = vmatprep.subr.bf16.mxu0 %v519
      %566 = vmatpush1.bf16.msra.mxu0 %v518
      %567 = vmatprep.subr.bf16.mxu0 0
      %568 = vmatpush1.bf16.msra.mxu0 0
      %569 = vmatprep.subr.bf16.mxu0 0
      %570 = vmatpush1.bf16.msra.mxu0 0
      %571 = vmatprep.subr.bf16.mxu0 0
      %572 = vmatpush1.bf16.msra.mxu0 0
      %573 = vmatprep.subr.bf16.mxu0 0
      %574 = vmatpush1.bf16.msra.mxu0 0
      %575 = vmatprep.subr.bf16.mxu0 0
      %576 = vmatpush1.bf16.msra.mxu0 0
      %577 = vmatprep.subr.bf16.mxu0 0
      %578 = vmatpush1.bf16.msra.mxu0 0
      %579 = vmatprep.mubr.bf16.mxu0 %v542
      %580 = vmatmul.mubr.bf16.gmra.mrb[0].mxu0 %v434
      %v581 = vpop.f32.mrb[0].mxu0
      %v582 = vadd.f32 %v415, %v581
      %v583 = vpop.f32.mrb[0].mxu0
      %v584 = vadd.f32 %v419, %v583
      %v585 = vpop.f32.mrb[0].mxu0
      %v586 = vadd.f32 %v415, %v585
      %v587 = vpop.f32.mrb[0].mxu0
      %v588 = vadd.f32 %v419, %v587
      %589 = vmatprep.mubr.bf16.mxu0 %v545
      %590 = vmatmul.mubr.bf16.gmra.mrb[0].mxu0 %v436
      %v591 = vpop.f32.mrb[0].mxu0
      %v592 = vadd.f32 %v415, %v591
      %v593 = vpop.f32.mrb[0].mxu0
      %v594 = vadd.f32 %v419, %v593
      %v595 = vpop.f32.mrb[0].mxu0
      %v596 = vadd.f32 %v415, %v595
      %v597 = vpop.f32.mrb[0].mxu0
      %v598 = vadd.f32 %v419, %v597
      %599 = vdwg.mxu0
      %v600 = vmax.f32 %v582, 0.0
      %v601 = vmax.f32 %v584, 0.0
      %v602 = vmax.f32 %v586, 0.0
      %v603 = vmax.f32 %v588, 0.0
      %v604 = vmax.f32 %v592, 0.0
      %v605 = vmax.f32 %v594, 0.0
      %v606 = vmax.f32 %v596, 0.0
      %v607 = vmax.f32 %v598, 0.0
      %v608 = vmax.f32 %v600, %v601
      %v609 = vmax.f32 %v602, %v603
      %v610 = vmax.f32 %v604, %v605
      %v611 = vmax.f32 %v606, %v607
      %v612 = vmax.f32 %v608, %v610
      %v613 = vmax.f32 %v609, %v611
      %vm616 = vcmask 1046528
      %v617 = vrot.slane %v612, 1
      %v618 = vrot.slane 0.0, 1
      %v619 = vsel %vm616, %v617, %v618
      %v622 = vrot.slane %v613, 1
      %v623 = vsel %vm616, %v622, %v618
      %vm625 = vcmask 1045504
      %v626 = vrot.slane %v612, 2
      %v627 = vrot.slane 0.0, 2
      %v628 = vsel %vm625, %v626, %v627
      %v630 = vrot.slane %v613, 2
      %v631 = vsel %vm625, %v630, %v627
      %v633 = vpack.c.bf16 %v613, %v612
      %v634 = vpack.c.bf16 %v619, %v613
      %v635 = vpack.c.bf16 %v623, %v619
      %v636 = vpack.c.bf16 %v628, %v623
      %v637 = vpack.c.bf16 %v631, %v628
      %v638 = vld [vmem:[%s3] sm:$0xff]
      %v639 = vld [vmem:[%s3 + $0x8] sm:$0xff]
      %v640 = vld [vmem:[%s3 + $0x10] sm:$0xff]
      %v641 = vld [vmem:[%s3 + $0x18] sm:$0xff]
      %v642 = vld [vmem:[%s3 + $0x20] sm:$0xff]
      %v643 = vld [vmem:[%s3 + $0x28] sm:$0xff]
      %v644 = vld [vmem:[%s3 + $0x30] sm:$0xff]
      %v645 = vld [vmem:[%s3 + $0x38] sm:$0xff]
      %v646 = vld [vmem:[%s3 + $0x40] sm:$0xff]
      %v647 = vld [vmem:[%s3 + $0x48] sm:$0xff]
      %v648 = vld [vmem:[%s3 + $0x50] sm:$0xff]
      %v649 = vld [vmem:[%s3 + $0x58] sm:$0xff]
      %v650 = vld [vmem:[%s3 + $0x60] sm:$0xff]
      %v651 = vld [vmem:[%s3 + $0x68] sm:$0xff]
      %v652 = vld [vmem:[%s3 + $0x70] sm:$0xff]
      %v653 = vld [vmem:[%s3 + $0x78] sm:$0xff]
      %v654 = vld [vmem:[%s3 + $0x80] sm:$0xff]
      %v655 = vld [vmem:[%s3 + $0x88] sm:$0xff]
      %v656 = vld [vmem:[%s3 + $0x90] sm:$0xff]
      %v657 = vld [vmem:[%s3 + $0x98] sm:$0xff]
      %v658 = vld [vmem:[%s3 + $0xa0] sm:$0xff]
      %v659 = vld [vmem:[%s3 + $0xa8] sm:$0xff]
      %v660 = vld [vmem:[%s3 + $0xb0] sm:$0xff]
      %v661 = vld [vmem:[%s3 + $0xb8] sm:$0xff]
      %v662 = vld [vmem:[%s3 + $0xc0] sm:$0xff]
      %v663 = vld [vmem:[%s3 + $0xc8] sm:$0xff]
      %v664 = vld [vmem:[%s3 + $0xd0] sm:$0xff]
      %v665 = vld [vmem:[%s3 + $0xd8] sm:$0xff]
      %v666 = vld [vmem:[%s3 + $0xe0] sm:$0xff]
      %v667 = vld [vmem:[%s3 + $0xe8] sm:$0xff]
      %v668 = vld [vmem:[%s3 + $0xf0] sm:$0xff]
      %v669 = vld [vmem:[%s3 + $0xf8] sm:$0xff]
      %v670 = vld [vmem:[%s3 + $0x100] sm:$0xff]
      %v671 = vld [vmem:[%s3 + $0x108] sm:$0xff]
      %v672 = vld [vmem:[%s3 + $0x110] sm:$0xff]
      %v673 = vld [vmem:[%s3 + $0x118] sm:$0xff]
      %v674 = vld [vmem:[%s3 + $0x120] sm:$0xff]
      %v675 = vld [vmem:[%s3 + $0x128] sm:$0xff]
      %v676 = vld [vmem:[%s3 + $0x130] sm:$0xff]
      %v677 = vld [vmem:[%s3 + $0x138] sm:$0xff]
      %v678 = vld [vmem:[%s3 + $0x140] sm:$0xff]
      %v679 = vld [vmem:[%s3 + $0x148] sm:$0xff]
      %v680 = vld [vmem:[%s3 + $0x150] sm:$0xff]
      %v681 = vld [vmem:[%s3 + $0x158] sm:$0xff]
      %v682 = vld [vmem:[%s3 + $0x160] sm:$0xff]
      %v683 = vld [vmem:[%s3 + $0x168] sm:$0xff]
      %v684 = vld [vmem:[%s3 + $0x170] sm:$0xff]
      %v685 = vld [vmem:[%s3 + $0x178] sm:$0xff]
      %v686 = vld [vmem:[%s3 + $0x180] sm:$0xff]
      %v687 = vld [vmem:[%s3 + $0x188] sm:$0xff]
      %v688 = vld [vmem:[%s3 + $0x190] sm:$0xff]
      %v689 = vld [vmem:[%s3 + $0x198] sm:$0xff]
      %v690 = vld [vmem:[%s3 + $0x1a0] sm:$0xff]
      %v691 = vld [vmem:[%s3 + $0x1a8] sm:$0xff]
      %v692 = vld [vmem:[%s3 + $0x1b0] sm:$0xff]
      %v693 = vld [vmem:[%s3 + $0x1b8] sm:$0xff]
      %v694 = vld [vmem:[%s3 + $0x1c0] sm:$0xff]
      %v695 = vld [vmem:[%s3 + $0x1c8] sm:$0xff]
      %v696 = vld [vmem:[%s3 + $0x1d0] sm:$0xff]
      %v697 = vld [vmem:[%s3 + $0x1d8] sm:$0xff]
      %v698 = vld [vmem:[%s3 + $0x1e0] sm:$0xff]
      %v699 = vld [vmem:[%s3 + $0x1e8] sm:$0xff]
      %v700 = vld [vmem:[%s3 + $0x1f0] sm:$0xff]
      %v701 = vld [vmem:[%s3 + $0x1f8] sm:$0xff]
      %v702 = vld [vmem:[%s3 + $0x200] sm:$0xff]
      %v703 = vld [vmem:[%s3 + $0x208] sm:$0xff]
      %v704 = vld [vmem:[%s3 + $0x210] sm:$0xff]
      %v705 = vld [vmem:[%s3 + $0x218] sm:$0xff]
      %v706 = vld [vmem:[%s3 + $0x220] sm:$0xff]
      %v707 = vld [vmem:[%s3 + $0x228] sm:$0xff]
      %v708 = vld [vmem:[%s3 + $0x230] sm:$0xff]
      %v709 = vld [vmem:[%s3 + $0x238] sm:$0xff]
      %v710 = vld [vmem:[%s3 + $0x240] sm:$0xff]
      %v711 = vld [vmem:[%s3 + $0x248] sm:$0xff]
      %v712 = vld [vmem:[%s3 + $0x250] sm:$0xff]
      %v713 = vld [vmem:[%s3 + $0x258] sm:$0xff]
      %v714 = vld [vmem:[%s3 + $0x260] sm:$0xff]
      %v715 = vld [vmem:[%s3 + $0x268] sm:$0xff]
      %v716 = vld [vmem:[%s3 + $0x270] sm:$0xff]
      %v717 = vld [vmem:[%s3 + $0x278] sm:$0xff]
      %v718 = vld [vmem:[%s4] sm:$0x3]
      %v720 = vlaneseq
      %v721 = vshrl.u32 %v720, 7
      %v722 = vsub.s32 0, %v721
      %v723 = vrot.slane %v718, %v722
      %v724 = vlaneseq
      %v725 = vshrl.u32 %v724, 7
      %v726 = vsub.s32 1, %v725
      %v727 = vrot.slane %v718, %v726
      %v810 = vunpack.c.l.b16 %v638
      %v811 = vunpack.c.h.b16 %v638
      %v812 = vunpack.c.l.b16 %v639
      %v813 = vunpack.c.h.b16 %v639
      %v814 = vunpack.c.l.b16 %v640
      %v815 = vunpack.c.h.b16 %v640
      %v816 = vunpack.c.l.b16 %v641
      %v817 = vunpack.c.h.b16 %v641
      %v818 = vunpack.c.l.b16 %v642
      %v819 = vunpack.c.h.b16 %v642
      %v820 = vunpack.c.l.b16 %v643
      %v821 = vunpack.c.h.b16 %v643
      %v822 = vunpack.c.l.b16 %v644
      %v823 = vunpack.c.h.b16 %v644
      %v824 = vunpack.c.l.b16 %v645
      %v825 = vunpack.c.h.b16 %v645
      %v826 = vunpack.c.l.b16 %v646
      %v827 = vunpack.c.h.b16 %v646
      %v828 = vunpack.c.l.b16 %v647
      %v829 = vunpack.c.h.b16 %v647
      %v830 = vunpack.c.l.b16 %v648
      %v831 = vunpack.c.h.b16 %v648
      %v832 = vunpack.c.l.b16 %v649
      %v833 = vunpack.c.h.b16 %v649
      %v834 = vunpack.c.l.b16 %v650
      %v835 = vunpack.c.h.b16 %v650
      %v836 = vunpack.c.l.b16 %v651
      %v837 = vunpack.c.h.b16 %v651
      %v838 = vunpack.c.l.b16 %v652
      %v839 = vunpack.c.h.b16 %v652
      %v840 = vunpack.c.l.b16 %v653
      %v841 = vunpack.c.h.b16 %v653
      %v842 = vunpack.c.l.b16 %v654
      %v843 = vunpack.c.h.b16 %v654
      %v844 = vunpack.c.l.b16 %v655
      %v845 = vunpack.c.h.b16 %v655
      %v846 = vunpack.c.l.b16 %v656
      %v847 = vunpack.c.h.b16 %v656
      %v848 = vunpack.c.l.b16 %v657
      %v849 = vunpack.c.h.b16 %v657
      %v850 = vunpack.c.l.b16 %v658
      %v851 = vunpack.c.h.b16 %v658
      %v852 = vunpack.c.l.b16 %v659
      %v853 = vunpack.c.h.b16 %v659
      %v854 = vunpack.c.l.b16 %v660
      %v855 = vunpack.c.h.b16 %v660
      %v856 = vunpack.c.l.b16 %v661
      %v857 = vunpack.c.h.b16 %v661
      %v858 = vunpack.c.l.b16 %v662
      %v859 = vunpack.c.h.b16 %v662
      %v860 = vunpack.c.l.b16 %v663
      %v861 = vunpack.c.h.b16 %v663
      %v862 = vunpack.c.l.b16 %v664
      %v863 = vunpack.c.h.b16 %v664
      %v864 = vunpack.c.l.b16 %v665
      %v865 = vunpack.c.h.b16 %v665
      %v866 = vunpack.c.l.b16 %v666
      %v867 = vunpack.c.h.b16 %v666
      %v868 = vunpack.c.l.b16 %v667
      %v869 = vunpack.c.h.b16 %v667
      %v870 = vunpack.c.l.b16 %v668
      %v871 = vunpack.c.h.b16 %v668
      %v872 = vunpack.c.l.b16 %v669
      %v873 = vunpack.c.h.b16 %v669
      %v874 = vunpack.c.l.b16 %v670
      %v875 = vunpack.c.h.b16 %v670
      %v876 = vunpack.c.l.b16 %v671
      %v877 = vunpack.c.h.b16 %v671
      %v878 = vunpack.c.l.b16 %v672
      %v879 = vunpack.c.h.b16 %v672
      %v880 = vunpack.c.l.b16 %v673
      %v881 = vunpack.c.h.b16 %v673
      %v882 = vunpack.c.l.b16 %v674
      %v883 = vunpack.c.h.b16 %v674
      %v884 = vunpack.c.l.b16 %v675
      %v885 = vunpack.c.h.b16 %v675
      %v886 = vunpack.c.l.b16 %v676
      %v887 = vunpack.c.h.b16 %v676
      %v888 = vunpack.c.l.b16 %v677
      %v889 = vunpack.c.h.b16 %v677
      %v890 = vunpack.c.l.b16 %v678
      %v891 = vunpack.c.h.b16 %v678
      %v892 = vunpack.c.l.b16 %v679
      %v893 = vunpack.c.h.b16 %v679
      %v894 = vunpack.c.l.b16 %v680
      %v895 = vunpack.c.h.b16 %v680
      %v896 = vunpack.c.l.b16 %v681
      %v897 = vunpack.c.h.b16 %v681
      %v898 = vunpack.c.l.b16 %v682
      %v899 = vunpack.c.h.b16 %v682
      %v900 = vunpack.c.l.b16 %v683
      %v901 = vunpack.c.h.b16 %v683
      %v902 = vunpack.c.l.b16 %v684
      %v903 = vunpack.c.h.b16 %v684
      %v904 = vunpack.c.l.b16 %v685
      %v905 = vunpack.c.h.b16 %v685
      %v906 = vunpack.c.l.b16 %v686
      %v907 = vunpack.c.h.b16 %v686
      %v908 = vunpack.c.l.b16 %v687
      %v909 = vunpack.c.h.b16 %v687
      %v910 = vunpack.c.l.b16 %v688
      %v911 = vunpack.c.h.b16 %v688
      %v912 = vunpack.c.l.b16 %v689
      %v913 = vunpack.c.h.b16 %v689
      %v914 = vunpack.c.l.b16 %v690
      %v915 = vunpack.c.h.b16 %v690
      %v916 = vunpack.c.l.b16 %v691
      %v917 = vunpack.c.h.b16 %v691
      %v918 = vunpack.c.l.b16 %v692
      %v919 = vunpack.c.h.b16 %v692
      %v920 = vunpack.c.l.b16 %v693
      %v921 = vunpack.c.h.b16 %v693
      %v922 = vunpack.c.l.b16 %v694
      %v923 = vunpack.c.h.b16 %v694
      %v924 = vunpack.c.l.b16 %v695
      %v925 = vunpack.c.h.b16 %v695
      %v926 = vunpack.c.l.b16 %v696
      %v927 = vunpack.c.h.b16 %v696
      %v928 = vunpack.c.l.b16 %v697
      %v929 = vunpack.c.h.b16 %v697
      %v930 = vunpack.c.l.b16 %v698
      %v931 = vunpack.c.h.b16 %v698
      %v932 = vunpack.c.l.b16 %v699
      %v933 = vunpack.c.h.b16 %v699
      %v934 = vunpack.c.l.b16 %v700
      %v935 = vunpack.c.h.b16 %v700
      %v936 = vunpack.c.l.b16 %v701
      %v937 = vunpack.c.h.b16 %v701
      %v938 = vunpack.c.l.b16 %v702
      %v939 = vunpack.c.h.b16 %v702
      %v940 = vunpack.c.l.b16 %v703
      %v941 = vunpack.c.h.b16 %v703
      %v942 = vunpack.c.l.b16 %v704
      %v943 = vunpack.c.h.b16 %v704
      %v944 = vunpack.c.l.b16 %v705
      %v945 = vunpack.c.h.b16 %v705
      %v946 = vunpack.c.l.b16 %v706
      %v947 = vunpack.c.h.b16 %v706
      %v948 = vunpack.c.l.b16 %v707
      %v949 = vunpack.c.h.b16 %v707
      %v950 = vunpack.c.l.b16 %v708
      %v951 = vunpack.c.h.b16 %v708
      %v952 = vunpack.c.l.b16 %v709
      %v953 = vunpack.c.h.b16 %v709
      %v954 = vunpack.c.l.b16 %v710
      %v955 = vunpack.c.h.b16 %v710
      %v956 = vunpack.c.l.b16 %v711
      %v957 = vunpack.c.h.b16 %v711
      %v958 = vunpack.c.l.b16 %v712
      %v959 = vunpack.c.h.b16 %v712
      %v960 = vunpack.c.l.b16 %v713
      %v961 = vunpack.c.h.b16 %v713
      %v962 = vunpack.c.l.b16 %v714
      %v963 = vunpack.c.h.b16 %v714
      %v964 = vunpack.c.l.b16 %v715
      %v965 = vunpack.c.h.b16 %v715
      %v966 = vunpack.c.l.b16 %v716
      %v967 = vunpack.c.h.b16 %v716
      %v968 = vunpack.c.l.b16 %v717
      %v969 = vunpack.c.h.b16 %v717
      %v970 = vpack.c.b16 %v812, %v810
      %v971 = vpack.c.b16 %v813, %v811
      %v972 = vpack.c.b16 %v816, %v814
      %v973 = vpack.c.b16 %v817, %v815
      %v974 = vpack.c.b16 %v820, %v818
      %v975 = vpack.c.b16 %v821, %v819
      %v976 = vpack.c.b16 %v824, %v822
      %v977 = vpack.c.b16 %v825, %v823
      %v978 = vpack.c.b16 %v828, %v826
      %v979 = vpack.c.b16 %v829, %v827
      %v980 = vpack.c.b16 %v832, %v830
      %v981 = vpack.c.b16 %v833, %v831
      %v982 = vpack.c.b16 %v836, %v834
      %v983 = vpack.c.b16 %v837, %v835
      %v984 = vpack.c.b16 %v840, %v838
      %v985 = vpack.c.b16 %v841, %v839
      %v986 = vpack.c.b16 %v844, %v842
      %v987 = vpack.c.b16 %v845, %v843
      %v988 = vpack.c.b16 %v848, %v846
      %v989 = vpack.c.b16 %v849, %v847
      %v990 = vpack.c.b16 %v852, %v850
      %v991 = vpack.c.b16 %v853, %v851
      %v992 = vpack.c.b16 %v856, %v854
      %v993 = vpack.c.b16 %v857, %v855
      %v994 = vpack.c.b16 %v860, %v858
      %v995 = vpack.c.b16 %v861, %v859
      %v996 = vpack.c.b16 %v864, %v862
      %v997 = vpack.c.b16 %v865, %v863
      %v998 = vpack.c.b16 %v868, %v866
      %v999 = vpack.c.b16 %v869, %v867
      %v1000 = vpack.c.b16 %v872, %v870
      %v1001 = vpack.c.b16 %v873, %v871
      %v1002 = vpack.c.b16 %v876, %v874
      %v1003 = vpack.c.b16 %v877, %v875
      %v1004 = vpack.c.b16 %v880, %v878
      %v1005 = vpack.c.b16 %v881, %v879
      %v1006 = vpack.c.b16 %v884, %v882
      %v1007 = vpack.c.b16 %v885, %v883
      %v1008 = vpack.c.b16 %v888, %v886
      %v1009 = vpack.c.b16 %v889, %v887
      %v1010 = vpack.c.b16 %v892, %v890
      %v1011 = vpack.c.b16 %v893, %v891
      %v1012 = vpack.c.b16 %v896, %v894
      %v1013 = vpack.c.b16 %v897, %v895
      %v1014 = vpack.c.b16 %v900, %v898
      %v1015 = vpack.c.b16 %v901, %v899
      %v1016 = vpack.c.b16 %v904, %v902
      %v1017 = vpack.c.b16 %v905, %v903
      %v1018 = vpack.c.b16 %v908, %v906
      %v1019 = vpack.c.b16 %v909, %v907
      %v1020 = vpack.c.b16 %v912, %v910
      %v1021 = vpack.c.b16 %v913, %v911
      %v1022 = vpack.c.b16 %v916, %v914
      %v1023 = vpack.c.b16 %v917, %v915
      %v1024 = vpack.c.b16 %v920, %v918
      %v1025 = vpack.c.b16 %v921, %v919
      %v1026 = vpack.c.b16 %v924, %v922
      %v1027 = vpack.c.b16 %v925, %v923
      %v1028 = vpack.c.b16 %v928, %v926
      %v1029 = vpack.c.b16 %v929, %v927
      %v1030 = vpack.c.b16 %v932, %v930
      %v1031 = vpack.c.b16 %v933, %v931
      %v1032 = vpack.c.b16 %v936, %v934
      %v1033 = vpack.c.b16 %v937, %v935
      %v1034 = vpack.c.b16 %v940, %v938
      %v1035 = vpack.c.b16 %v941, %v939
      %v1036 = vpack.c.b16 %v944, %v942
      %v1037 = vpack.c.b16 %v945, %v943
      %v1038 = vpack.c.b16 %v948, %v946
      %v1039 = vpack.c.b16 %v949, %v947
      %v1040 = vpack.c.b16 %v952, %v950
      %v1041 = vpack.c.b16 %v953, %v951
      %v1042 = vpack.c.b16 %v956, %v954
      %v1043 = vpack.c.b16 %v957, %v955
      %v1044 = vpack.c.b16 %v960, %v958
      %v1045 = vpack.c.b16 %v961, %v959
      %v1046 = vpack.c.b16 %v964, %v962
      %v1047 = vpack.c.b16 %v965, %v963
      %v1048 = vpack.c.b16 %v968, %v966
      %v1049 = vpack.c.b16 %v969, %v967
      %1130 = vmatprep.subr.bf16.mxu0 %v971
      %1131 = vmatpush1.bf16.msra.mxu0 %v970
      %1132 = vmatprep.subr.bf16.mxu0 %v973
      %1133 = vmatpush1.bf16.msra.mxu0 %v972
      %1134 = vmatprep.subr.bf16.mxu0 %v975
      %1135 = vmatpush1.bf16.msra.mxu0 %v974
      %1136 = vmatprep.subr.bf16.mxu0 %v977
      %1137 = vmatpush1.bf16.msra.mxu0 %v976
      %1138 = vmatprep.subr.bf16.mxu0 %v979
      %1139 = vmatpush1.bf16.msra.mxu0 %v978
      %1140 = vmatprep.subr.bf16.mxu0 %v981
      %1141 = vmatpush1.bf16.msra.mxu0 %v980
      %1142 = vmatprep.subr.bf16.mxu0 %v983
      %1143 = vmatpush1.bf16.msra.mxu0 %v982
      %1144 = vmatprep.subr.bf16.mxu0 %v985
      %1145 = vmatpush1.bf16.msra.mxu0 %v984
      %1146 = vmatprep.subr.bf16.mxu0 %v987
      %1147 = vmatpush1.bf16.msra.mxu0 %v986
      %1148 = vmatprep.subr.bf16.mxu0 %v989
      %1149 = vmatpush1.bf16.msra.mxu0 %v988
      %1150 = vmatprep.subr.bf16.mxu0 %v991
      %1151 = vmatpush1.bf16.msra.mxu0 %v990
      %1152 = vmatprep.subr.bf16.mxu0 %v993
      %1153 = vmatpush1.bf16.msra.mxu0 %v992
      %1154 = vmatprep.subr.bf16.mxu0 %v995
      %1155 = vmatpush1.bf16.msra.mxu0 %v994
      %1156 = vmatprep.subr.bf16.mxu0 %v997
      %1157 = vmatpush1.bf16.msra.mxu0 %v996
      %1158 = vmatprep.subr.bf16.mxu0 %v999
      %1159 = vmatpush1.bf16.msra.mxu0 %v998
      %1160 = vmatprep.subr.bf16.mxu0 %v1001
      %1161 = vmatpush1.bf16.msra.mxu0 %v1000
      %1162 = vmatprep.mubr.bf16.mxu0 %v634
      %1163 = vmatmul.mubr.bf16.gmra.mrb[0].mxu0 %v633
      %v1164 = vpop.f32.mrb[0].mxu0
      %v1165 = vadd.f32 %v723, %v1164
      %v1166 = vpop.f32.mrb[0].mxu0
      %v1167 = vadd.f32 %v727, %v1166
      %v1168 = vpop.f32.mrb[0].mxu0
      %v1169 = vadd.f32 %v723, %v1168
      %v1170 = vpop.f32.mrb[0].mxu0
      %v1171 = vadd.f32 %v727, %v1170
      %1172 = vdwg.mxu0
      %1173 = vmatprep.subr.bf16.mxu0 %v1003
      %1174 = vmatpush1.bf16.msra.mxu0 %v1002
      %1175 = vmatprep.subr.bf16.mxu0 %v1005
      %1176 = vmatpush1.bf16.msra.mxu0 %v1004
      %1177 = vmatprep.subr.bf16.mxu0 %v1007
      %1178 = vmatpush1.bf16.msra.mxu0 %v1006
      %1179 = vmatprep.subr.bf16.mxu0 %v1009
      %1180 = vmatpush1.bf16.msra.mxu0 %v1008
      %1181 = vmatprep.subr.bf16.mxu0 %v1011
      %1182 = vmatpush1.bf16.msra.mxu0 %v1010
      %1183 = vmatprep.subr.bf16.mxu0 %v1013
      %1184 = vmatpush1.bf16.msra.mxu0 %v1012
      %1185 = vmatprep.subr.bf16.mxu0 %v1015
      %1186 = vmatpush1.bf16.msra.mxu0 %v1014
      %1187 = vmatprep.subr.bf16.mxu0 %v1017
      %1188 = vmatpush1.bf16.msra.mxu0 %v1016
      %1189 = vmatprep.subr.bf16.mxu0 %v1019
      %1190 = vmatpush1.bf16.msra.mxu0 %v1018
      %1191 = vmatprep.subr.bf16.mxu0 %v1021
      %1192 = vmatpush1.bf16.msra.mxu0 %v1020
      %1193 = vmatprep.subr.bf16.mxu0 %v1023
      %1194 = vmatpush1.bf16.msra.mxu0 %v1022
      %1195 = vmatprep.subr.bf16.mxu0 %v1025
      %1196 = vmatpush1.bf16.msra.mxu0 %v1024
      %1197 = vmatprep.subr.bf16.mxu0 %v1027
      %1198 = vmatpush1.bf16.msra.mxu0 %v1026
      %1199 = vmatprep.subr.bf16.mxu0 %v1029
      %1200 = vmatpush1.bf16.msra.mxu0 %v1028
      %1201 = vmatprep.subr.bf16.mxu0 %v1031
      %1202 = vmatpush1.bf16.msra.mxu0 %v1030
      %1203 = vmatprep.subr.bf16.mxu0 %v1033
      %1204 = vmatpush1.bf16.msra.mxu0 %v1032
      %1205 = vmatprep.mubr.bf16.mxu0 %v636
      %1206 = vmatmul.mubr.bf16.gmra.mrb[0].mxu0 %v635
      %v1207 = vpop.f32.mrb[0].mxu0
      %v1208 = vadd.f32 %v1165, %v1207
      %v1209 = vpop.f32.mrb[0].mxu0
      %v1210 = vadd.f32 %v1167, %v1209
      %v1211 = vpop.f32.mrb[0].mxu0
      %v1212 = vadd.f32 %v1169, %v1211
      %v1213 = vpop.f32.mrb[0].mxu0
      %v1214 = vadd.f32 %v1171, %v1213
      %1215 = vdwg.mxu0
      %1216 = vmatprep.subr.bf16.mxu0 %v1035
      %1217 = vmatpush1.bf16.msra.mxu0 %v1034
      %1218 = vmatprep.subr.bf16.mxu0 %v1037
      %1219 = vmatpush1.bf16.msra.mxu0 %v1036
      %1220 = vmatprep.subr.bf16.mxu0 %v1039
      %1221 = vmatpush1.bf16.msra.mxu0 %v1038
      %1222 = vmatprep.subr.bf16.mxu0 %v1041
      %1223 = vmatpush1.bf16.msra.mxu0 %v1040
      %1224 = vmatprep.subr.bf16.mxu0 %v1043
      %1225 = vmatpush1.bf16.msra.mxu0 %v1042
      %1226 = vmatprep.subr.bf16.mxu0 %v1045
      %1227 = vmatpush1.bf16.msra.mxu0 %v1044
      %1228 = vmatprep.subr.bf16.mxu0 %v1047
      %1229 = vmatpush1.bf16.msra.mxu0 %v1046
      %1230 = vmatprep.subr.bf16.mxu0 %v1049
      %1231 = vmatpush1.bf16.msra.mxu0 %v1048
      %1232 = vmatprep.subr.bf16.mxu0 0
      %1233 = vmatpush1.bf16.msra.mxu0 0
      %1234 = vmatprep.subr.bf16.mxu0 0
      %1235 = vmatpush1.bf16.msra.mxu0 0
      %1236 = vmatprep.subr.bf16.mxu0 0
      %1237 = vmatpush1.bf16.msra.mxu0 0
      %1238 = vmatprep.subr.bf16.mxu0 0
      %1239 = vmatpush1.bf16.msra.mxu0 0
      %1240 = vmatprep.subr.bf16.mxu0 0
      %1241 = vmatpush1.bf16.msra.mxu0 0
      %1242 = vmatprep.subr.bf16.mxu0 0
      %1243 = vmatpush1.bf16.msra.mxu0 0
      %1244 = vmatprep.subr.bf16.mxu0 0
      %1245 = vmatpush1.bf16.msra.mxu0 0
      %1246 = vmatprep.subr.bf16.mxu0 0
      %1247 = vmatpush1.bf16.msra.mxu0 0
      %1248 = vmatprep.mubr.bf16.mxu0 0
      %1249 = vmatmul.mubr.bf16.gmra.mrb[0].mxu0 %v637
      %v1250 = vpop.f32.mrb[0].mxu0
      %v1251 = vadd.f32 %v1208, %v1250
      %v1252 = vpop.f32.mrb[0].mxu0
      %v1253 = vadd.f32 %v1210, %v1252
      %v1254 = vpop.f32.mrb[0].mxu0
      %v1255 = vadd.f32 %v1212, %v1254
      %v1256 = vpop.f32.mrb[0].mxu0
      %v1257 = vadd.f32 %v1214, %v1256
      %1258 = vdwg.mxu0
      %v1259 = vmax.f32 %v1251, 0.0
      %v1260 = vmax.f32 %v1253, 0.0
      %v1261 = vmax.f32 %v1255, 0.0
      %v1262 = vmax.f32 %v1257, 0.0
      %v1263 = vmax.f32 %v1259, %v1260
      %v1264 = vmax.f32 %v1261, %v1262
      %v1265 = vmax.f32 %v1263, %v1264
      %v1267 = vrot.slane %v1265, 1
      %v1269 = vrot.slane %v1265, 2
      %v1271 = vrot.slane %v1265, 3
      %v1273 = vrot.slane %v1265, 4
      %vm1275 = vcmask 1040384
      %v1276 = vsel %vm1275, %v1265, 0.0
      %v1277 = vsel %vm1275, %v1267, 0.0
      %v1278 = vsel %vm1275, %v1269, 0.0
      %v1279 = vsel %vm1275, %v1271, 0.0
      %v1280 = vsel %vm1275, %v1273, 0.0
      %v1281 = vpack.c.bf16 %v1276, %v1276
      %v1282 = vpack.c.bf16 %v1277, %v1277
      %v1283 = vpack.c.bf16 %v1278, %v1278
      %v1284 = vpack.c.bf16 %v1279, %v1279
      %v1285 = vpack.c.bf16 %v1280, %v1280
      %v1286 = vld [vmem:[%s5] sm:$0xf]
      %v1287 = vld [vmem:[%s5 + $0x4] sm:$0xf]
      %v1288 = vld [vmem:[%s5 + $0x8] sm:$0xf]
      %v1289 = vld [vmem:[%s5 + $0xc] sm:$0xf]
      %v1290 = vld [vmem:[%s5 + $0x10] sm:$0xf]
      %v1291 = vld [vmem:[%s5 + $0x14] sm:$0xf]
      %v1292 = vld [vmem:[%s5 + $0x18] sm:$0xf]
      %v1293 = vld [vmem:[%s5 + $0x1c] sm:$0xf]
      %v1294 = vld [vmem:[%s5 + $0x20] sm:$0xf]
      %v1295 = vld [vmem:[%s5 + $0x24] sm:$0xf]
      %v1296 = vld [vmem:[%s5 + $0x28] sm:$0xf]
      %v1297 = vld [vmem:[%s5 + $0x2c] sm:$0xf]
      %v1298 = vld [vmem:[%s5 + $0x30] sm:$0xf]
      %v1299 = vld [vmem:[%s5 + $0x34] sm:$0xf]
      %v1300 = vld [vmem:[%s5 + $0x38] sm:$0xf]
      %v1301 = vld [vmem:[%s5 + $0x3c] sm:$0xf]
      %v1302 = vld [vmem:[%s5 + $0x40] sm:$0xf]
      %v1303 = vld [vmem:[%s5 + $0x44] sm:$0xf]
      %v1304 = vld [vmem:[%s5 + $0x48] sm:$0xf]
      %v1305 = vld [vmem:[%s5 + $0x4c] sm:$0xf]
      %v1306 = vld [vmem:[%s5 + $0x50] sm:$0xf]
      %v1307 = vld [vmem:[%s5 + $0x54] sm:$0xf]
      %v1308 = vld [vmem:[%s5 + $0x58] sm:$0xf]
      %v1309 = vld [vmem:[%s5 + $0x5c] sm:$0xf]
      %v1310 = vld [vmem:[%s5 + $0x60] sm:$0xf]
      %v1311 = vld [vmem:[%s5 + $0x64] sm:$0xf]
      %v1312 = vld [vmem:[%s5 + $0x68] sm:$0xf]
      %v1313 = vld [vmem:[%s5 + $0x6c] sm:$0xf]
      %v1314 = vld [vmem:[%s5 + $0x70] sm:$0xf]
      %v1315 = vld [vmem:[%s5 + $0x74] sm:$0xf]
      %v1316 = vld [vmem:[%s5 + $0x78] sm:$0xf]
      %v1317 = vld [vmem:[%s5 + $0x7c] sm:$0xf]
      %v1318 = vld [vmem:[%s5 + $0x80] sm:$0xf]
      %v1319 = vld [vmem:[%s5 + $0x84] sm:$0xf]
      %v1320 = vld [vmem:[%s5 + $0x88] sm:$0xf]
      %v1321 = vld [vmem:[%s5 + $0x8c] sm:$0xf]
      %v1322 = vld [vmem:[%s5 + $0x90] sm:$0xf]
      %v1323 = vld [vmem:[%s5 + $0x94] sm:$0xf]
      %v1324 = vld [vmem:[%s5 + $0x98] sm:$0xf]
      %v1325 = vld [vmem:[%s5 + $0x9c] sm:$0xf]
      %v1326 = vld [vmem:[%s5 + $0xa0] sm:$0xf]
      %v1327 = vld [vmem:[%s5 + $0xa4] sm:$0xf]
      %v1328 = vld [vmem:[%s5 + $0xa8] sm:$0xf]
      %v1329 = vld [vmem:[%s5 + $0xac] sm:$0xf]
      %v1330 = vld [vmem:[%s5 + $0xb0] sm:$0xf]
      %v1331 = vld [vmem:[%s5 + $0xb4] sm:$0xf]
      %v1332 = vld [vmem:[%s5 + $0xb8] sm:$0xf]
      %v1333 = vld [vmem:[%s5 + $0xbc] sm:$0xf]
      %v1334 = vld [vmem:[%s5 + $0xc0] sm:$0xf]
      %v1335 = vld [vmem:[%s5 + $0xc4] sm:$0xf]
      %v1336 = vld [vmem:[%s5 + $0xc8] sm:$0xf]
      %v1337 = vld [vmem:[%s5 + $0xcc] sm:$0xf]
      %v1338 = vld [vmem:[%s5 + $0xd0] sm:$0xf]
      %v1339 = vld [vmem:[%s5 + $0xd4] sm:$0xf]
      %v1340 = vld [vmem:[%s5 + $0xd8] sm:$0xf]
      %v1341 = vld [vmem:[%s5 + $0xdc] sm:$0xf]
      %v1342 = vld [vmem:[%s5 + $0xe0] sm:$0xf]
      %v1343 = vld [vmem:[%s5 + $0xe4] sm:$0xf]
      %v1344 = vld [vmem:[%s5 + $0xe8] sm:$0xf]
      %v1345 = vld [vmem:[%s5 + $0xec] sm:$0xf]
      %v1346 = vld [vmem:[%s5 + $0xf0] sm:$0xf]
      %v1347 = vld [vmem:[%s5 + $0xf4] sm:$0xf]
      %v1348 = vld [vmem:[%s5 + $0xf8] sm:$0xf]
      %v1349 = vld [vmem:[%s5 + $0xfc] sm:$0xf]
      %v1350 = vld [vmem:[%s5 + $0x100] sm:$0xf]
      %v1351 = vld [vmem:[%s5 + $0x104] sm:$0xf]
      %v1352 = vld [vmem:[%s5 + $0x108] sm:$0xf]
      %v1353 = vld [vmem:[%s5 + $0x10c] sm:$0xf]
      %v1354 = vld [vmem:[%s5 + $0x110] sm:$0xf]
      %v1355 = vld [vmem:[%s5 + $0x114] sm:$0xf]
      %v1356 = vld [vmem:[%s5 + $0x118] sm:$0xf]
      %v1357 = vld [vmem:[%s5 + $0x11c] sm:$0xf]
      %v1358 = vld [vmem:[%s5 + $0x120] sm:$0xf]
      %v1359 = vld [vmem:[%s5 + $0x124] sm:$0xf]
      %v1360 = vld [vmem:[%s5 + $0x128] sm:$0xf]
      %v1361 = vld [vmem:[%s5 + $0x12c] sm:$0xf]
      %v1362 = vld [vmem:[%s5 + $0x130] sm:$0xf]
      %v1363 = vld [vmem:[%s5 + $0x134] sm:$0xf]
      %v1364 = vld [vmem:[%s5 + $0x138] sm:$0xf]
      %v1365 = vld [vmem:[%s5 + $0x13c] sm:$0xf]
      %v1366 = vld [vmem:[%s6] sm:$0x1]
      %v1368 = vlaneseq
      %v1369 = vshrl.u32 %v1368, 7
      %v1370 = vsub.s32 0, %v1369
      %v1371 = vrot.slane %v1366, %v1370
      %v1453 = vunpack.c.l.b16 %v1286
      %v1454 = vunpack.c.l.b16 %v1287
      %v1455 = vunpack.c.l.b16 %v1288
      %v1456 = vunpack.c.l.b16 %v1289
      %v1457 = vunpack.c.l.b16 %v1290
      %v1458 = vunpack.c.l.b16 %v1291
      %v1459 = vunpack.c.l.b16 %v1292
      %v1460 = vunpack.c.l.b16 %v1293
      %v1461 = vunpack.c.l.b16 %v1294
      %v1462 = vunpack.c.l.b16 %v1295
      %v1463 = vunpack.c.l.b16 %v1296
      %v1464 = vunpack.c.l.b16 %v1297
      %v1465 = vunpack.c.l.b16 %v1298
      %v1466 = vunpack.c.l.b16 %v1299
      %v1467 = vunpack.c.l.b16 %v1300
      %v1468 = vunpack.c.l.b16 %v1301
      %v1469 = vunpack.c.l.b16 %v1302
      %v1470 = vunpack.c.l.b16 %v1303
      %v1471 = vunpack.c.l.b16 %v1304
      %v1472 = vunpack.c.l.b16 %v1305
      %v1473 = vunpack.c.l.b16 %v1306
      %v1474 = vunpack.c.l.b16 %v1307
      %v1475 = vunpack.c.l.b16 %v1308
      %v1476 = vunpack.c.l.b16 %v1309
      %v1477 = vunpack.c.l.b16 %v1310
      %v1478 = vunpack.c.l.b16 %v1311
      %v1479 = vunpack.c.l.b16 %v1312
      %v1480 = vunpack.c.l.b16 %v1313
      %v1481 = vunpack.c.l.b16 %v1314
      %v1482 = vunpack.c.l.b16 %v1315
      %v1483 = vunpack.c.l.b16 %v1316
      %v1484 = vunpack.c.l.b16 %v1317
      %v1485 = vunpack.c.l.b16 %v1318
      %v1486 = vunpack.c.l.b16 %v1319
      %v1487 = vunpack.c.l.b16 %v1320
      %v1488 = vunpack.c.l.b16 %v1321
      %v1489 = vunpack.c.l.b16 %v1322
      %v1490 = vunpack.c.l.b16 %v1323
      %v1491 = vunpack.c.l.b16 %v1324
      %v1492 = vunpack.c.l.b16 %v1325
      %v1493 = vunpack.c.l.b16 %v1326
      %v1494 = vunpack.c.l.b16 %v1327
      %v1495 = vunpack.c.l.b16 %v1328
      %v1496 = vunpack.c.l.b16 %v1329
      %v1497 = vunpack.c.l.b16 %v1330
      %v1498 = vunpack.c.l.b16 %v1331
      %v1499 = vunpack.c.l.b16 %v1332
      %v1500 = vunpack.c.l.b16 %v1333
      %v1501 = vunpack.c.l.b16 %v1334
      %v1502 = vunpack.c.l.b16 %v1335
      %v1503 = vunpack.c.l.b16 %v1336
      %v1504 = vunpack.c.l.b16 %v1337
      %v1505 = vunpack.c.l.b16 %v1338
      %v1506 = vunpack.c.l.b16 %v1339
      %v1507 = vunpack.c.l.b16 %v1340
      %v1508 = vunpack.c.l.b16 %v1341
      %v1509 = vunpack.c.l.b16 %v1342
      %v1510 = vunpack.c.l.b16 %v1343
      %v1511 = vunpack.c.l.b16 %v1344
      %v1512 = vunpack.c.l.b16 %v1345
      %v1513 = vunpack.c.l.b16 %v1346
      %v1514 = vunpack.c.l.b16 %v1347
      %v1515 = vunpack.c.l.b16 %v1348
      %v1516 = vunpack.c.l.b16 %v1349
      %v1517 = vunpack.c.l.b16 %v1350
      %v1518 = vunpack.c.l.b16 %v1351
      %v1519 = vunpack.c.l.b16 %v1352
      %v1520 = vunpack.c.l.b16 %v1353
      %v1521 = vunpack.c.l.b16 %v1354
      %v1522 = vunpack.c.l.b16 %v1355
      %v1523 = vunpack.c.l.b16 %v1356
      %v1524 = vunpack.c.l.b16 %v1357
      %v1525 = vunpack.c.l.b16 %v1358
      %v1526 = vunpack.c.l.b16 %v1359
      %v1527 = vunpack.c.l.b16 %v1360
      %v1528 = vunpack.c.l.b16 %v1361
      %v1529 = vunpack.c.l.b16 %v1362
      %v1530 = vunpack.c.l.b16 %v1363
      %v1531 = vunpack.c.l.b16 %v1364
      %v1532 = vunpack.c.l.b16 %v1365
      %v1533 = vpack.c.b16 %v1454, %v1453
      %v1534 = vpack.c.b16 %v1456, %v1455
      %v1535 = vpack.c.b16 %v1458, %v1457
      %v1536 = vpack.c.b16 %v1460, %v1459
      %v1537 = vpack.c.b16 %v1462, %v1461
      %v1538 = vpack.c.b16 %v1464, %v1463
      %v1539 = vpack.c.b16 %v1466, %v1465
      %v1540 = vpack.c.b16 %v1468, %v1467
      %v1541 = vpack.c.b16 %v1470, %v1469
      %v1542 = vpack.c.b16 %v1472, %v1471
      %v1543 = vpack.c.b16 %v1474, %v1473
      %v1544 = vpack.c.b16 %v1476, %v1475
      %v1545 = vpack.c.b16 %v1478, %v1477
      %v1546 = vpack.c.b16 %v1480, %v1479
      %v1547 = vpack.c.b16 %v1482, %v1481
      %v1548 = vpack.c.b16 %v1484, %v1483
      %v1549 = vpack.c.b16 %v1486, %v1485
      %v1550 = vpack.c.b16 %v1488, %v1487
      %v1551 = vpack.c.b16 %v1490, %v1489
      %v1552 = vpack.c.b16 %v1492, %v1491
      %v1553 = vpack.c.b16 %v1494, %v1493
      %v1554 = vpack.c.b16 %v1496, %v1495
      %v1555 = vpack.c.b16 %v1498, %v1497
      %v1556 = vpack.c.b16 %v1500, %v1499
      %v1557 = vpack.c.b16 %v1502, %v1501
      %v1558 = vpack.c.b16 %v1504, %v1503
      %v1559 = vpack.c.b16 %v1506, %v1505
      %v1560 = vpack.c.b16 %v1508, %v1507
      %v1561 = vpack.c.b16 %v1510, %v1509
      %v1562 = vpack.c.b16 %v1512, %v1511
      %v1563 = vpack.c.b16 %v1514, %v1513
      %v1564 = vpack.c.b16 %v1516, %v1515
      %v1565 = vpack.c.b16 %v1518, %v1517
      %v1566 = vpack.c.b16 %v1520, %v1519
      %v1567 = vpack.c.b16 %v1522, %v1521
      %v1568 = vpack.c.b16 %v1524, %v1523
      %v1569 = vpack.c.b16 %v1526, %v1525
      %v1570 = vpack.c.b16 %v1528, %v1527
      %v1571 = vpack.c.b16 %v1530, %v1529
      %v1572 = vpack.c.b16 %v1532, %v1531
      %1613 = vmatprep.subr.bf16.mxu0 0
      %1614 = vmatpush1.bf16.msra.mxu0 %v1533
      %1615 = vmatprep.subr.bf16.mxu0 0
      %1616 = vmatpush1.bf16.msra.mxu0 %v1534
      %1617 = vmatprep.subr.bf16.mxu0 0
      %1618 = vmatpush1.bf16.msra.mxu0 %v1535
      %1619 = vmatprep.subr.bf16.mxu0 0
      %1620 = vmatpush1.bf16.msra.mxu0 %v1536
      %1621 = vmatprep.subr.bf16.mxu0 0
      %1622 = vmatpush1.bf16.msra.mxu0 %v1537
      %1623 = vmatprep.subr.bf16.mxu0 0
      %1624 = vmatpush1.bf16.msra.mxu0 %v1538
      %1625 = vmatprep.subr.bf16.mxu0 0
      %1626 = vmatpush1.bf16.msra.mxu0 %v1539
      %1627 = vmatprep.subr.bf16.mxu0 0
      %1628 = vmatpush1.bf16.msra.mxu0 %v1540
      %1629 = vmatprep.subr.bf16.mxu0 0
      %1630 = vmatpush1.bf16.msra.mxu0 %v1541
      %1631 = vmatprep.subr.bf16.mxu0 0
      %1632 = vmatpush1.bf16.msra.mxu0 %v1542
      %1633 = vmatprep.subr.bf16.mxu0 0
      %1634 = vmatpush1.bf16.msra.mxu0 %v1543
      %1635 = vmatprep.subr.bf16.mxu0 0
      %1636 = vmatpush1.bf16.msra.mxu0 %v1544
      %1637 = vmatprep.subr.bf16.mxu0 0
      %1638 = vmatpush1.bf16.msra.mxu0 %v1545
      %1639 = vmatprep.subr.bf16.mxu0 0
      %1640 = vmatpush1.bf16.msra.mxu0 %v1546
      %1641 = vmatprep.subr.bf16.mxu0 0
      %1642 = vmatpush1.bf16.msra.mxu0 %v1547
      %1643 = vmatprep.subr.bf16.mxu0 0
      %1644 = vmatpush1.bf16.msra.mxu0 %v1548
      %1645 = vmatprep.mubr.bf16.mxu0 %v1282
      %1646 = vmatmul.mubr.bf16.gmra.mrb[0].mxu0 %v1281
      %v1647 = vpop.f32.mrb[0].mxu0
      %v1648 = vadd.f32 %v1371, %v1647
      %v1649 = vpop.f32.mrb[0].mxu0
      %v1650 = vpop.f32.mrb[0].mxu0
      %v1651 = vpop.f32.mrb[0].mxu0
      %1652 = vdwg.mxu0
      %1653 = vmatprep.subr.bf16.mxu0 0
      %1654 = vmatpush1.bf16.msra.mxu0 %v1549
      %1655 = vmatprep.subr.bf16.mxu0 0
      %1656 = vmatpush1.bf16.msra.mxu0 %v1550
      %1657 = vmatprep.subr.bf16.mxu0 0
      %1658 = vmatpush1.bf16.msra.mxu0 %v1551
      %1659 = vmatprep.subr.bf16.mxu0 0
      %1660 = vmatpush1.bf16.msra.mxu0 %v1552
      %1661 = vmatprep.subr.bf16.mxu0 0
      %1662 = vmatpush1.bf16.msra.mxu0 %v1553
      %1663 = vmatprep.subr.bf16.mxu0 0
      %1664 = vmatpush1.bf16.msra.mxu0 %v1554
      %1665 = vmatprep.subr.bf16.mxu0 0
      %1666 = vmatpush1.bf16.msra.mxu0 %v1555
      %1667 = vmatprep.subr.bf16.mxu0 0
      %1668 = vmatpush1.bf16.msra.mxu0 %v1556
      %1669 = vmatprep.subr.bf16.mxu0 0
      %1670 = vmatpush1.bf16.msra.mxu0 %v1557
      %1671 = vmatprep.subr.bf16.mxu0 0
      %1672 = vmatpush1.bf16.msra.mxu0 %v1558
      %1673 = vmatprep.subr.bf16.mxu0 0
      %1674 = vmatpush1.bf16.msra.mxu0 %v1559
      %1675 = vmatprep.subr.bf16.mxu0 0
      %1676 = vmatpush1.bf16.msra.mxu0 %v1560
      %1677 = vmatprep.subr.bf16.mxu0 0
      %1678 = vmatpush1.bf16.msra.mxu0 %v1561
      %1679 = vmatprep.subr.bf16.mxu0 0
      %1680 = vmatpush1.bf16.msra.mxu0 %v1562
      %1681 = vmatprep.subr.bf16.mxu0 0
      %1682 = vmatpush1.bf16.msra.mxu0 %v1563
      %1683 = vmatprep.subr.bf16.mxu0 0
      %1684 = vmatpush1.bf16.msra.mxu0 %v1564
      %1685 = vmatprep.mubr.bf16.mxu0 %v1284
      %1686 = vmatmul.mubr.bf16.gmra.mrb[0].mxu0 %v1283
      %v1687 = vpop.f32.mrb[0].mxu0
      %v1688 = vadd.f32 %v1648, %v1687
      %v1689 = vpop.f32.mrb[0].mxu0
      %v1690 = vpop.f32.mrb[0].mxu0
      %v1691 = vpop.f32.mrb[0].mxu0
      %1692 = vdwg.mxu0
      %1693 = vmatprep.subr.bf16.mxu0 0
      %1694 = vmatpush1.bf16.msra.mxu0 %v1565
      %1695 = vmatprep.subr.bf16.mxu0 0
      %1696 = vmatpush1.bf16.msra.mxu0 %v1566
      %1697 = vmatprep.subr.bf16.mxu0 0
      %1698 = vmatpush1.bf16.msra.mxu0 %v1567
      %1699 = vmatprep.subr.bf16.mxu0 0
      %1700 = vmatpush1.bf16.msra.mxu0 %v1568
      %1701 = vmatprep.subr.bf16.mxu0 0
      %1702 = vmatpush1.bf16.msra.mxu0 %v1569
      %1703 = vmatprep.subr.bf16.mxu0 0
      %1704 = vmatpush1.bf16.msra.mxu0 %v1570
      %1705 = vmatprep.subr.bf16.mxu0 0
      %1706 = vmatpush1.bf16.msra.mxu0 %v1571
      %1707 = vmatprep.subr.bf16.mxu0 0
      %1708 = vmatpush1.bf16.msra.mxu0 %v1572
      %1709 = vmatprep.subr.bf16.mxu0 0
      %1710 = vmatpush1.bf16.msra.mxu0 0
      %1711 = vmatprep.subr.bf16.mxu0 0
      %1712 = vmatpush1.bf16.msra.mxu0 0
      %1713 = vmatprep.subr.bf16.mxu0 0
      %1714 = vmatpush1.bf16.msra.mxu0 0
      %1715 = vmatprep.subr.bf16.mxu0 0
      %1716 = vmatpush1.bf16.msra.mxu0 0
      %1717 = vmatprep.subr.bf16.mxu0 0
      %1718 = vmatpush1.bf16.msra.mxu0 0
      %1719 = vmatprep.subr.bf16.mxu0 0
      %1720 = vmatpush1.bf16.msra.mxu0 0
      %1721 = vmatprep.subr.bf16.mxu0 0
      %1722 = vmatpush1.bf16.msra.mxu0 0
      %1723 = vmatprep.subr.bf16.mxu0 0
      %1724 = vmatpush1.bf16.msra.mxu0 0
      %1725 = vmatprep.mubr.bf16.mxu0 0
      %1726 = vmatmul.mubr.bf16.gmra.mrb[0].mxu0 %v1285
      %v1727 = vpop.f32.mrb[0].mxu0
      %v1728 = vadd.f32 %v1688, %v1727
      %v1729 = vpop.f32.mrb[0].mxu0
      %v1730 = vpop.f32.mrb[0].mxu0
      %v1731 = vpop.f32.mrb[0].mxu0
      %1732 = vdwg.mxu0
      %v1733 = vmax.f32 %v1728, 0.0
      %v1734 = vpack.c.bf16 %v1733, %v1733
      %v1735 = vld [vmem:[%s7] sm:$0xf]
      %v1736 = vld [vmem:[%s7 + $0x4] sm:$0xf]
      %v1737 = vld [vmem:[%s7 + $0x8] sm:$0xf]
      %v1738 = vld [vmem:[%s7 + $0xc] sm:$0xf]
      %v1739 = vld [vmem:[%s7 + $0x10] sm:$0xf]
      %v1740 = vld [vmem:[%s7 + $0x14] sm:$0xf]
      %v1741 = vld [vmem:[%s7 + $0x18] sm:$0xf]
      %v1742 = vld [vmem:[%s7 + $0x1c] sm:$0xf]
      %v1743 = vld [vmem:[%s7 + $0x20] sm:$0xf]
      %v1744 = vld [vmem:[%s7 + $0x24] sm:$0xf]
      %v1745 = vld [vmem:[%s7 + $0x28] sm:$0xf]
      %v1746 = vld [vmem:[%s7 + $0x2c] sm:$0xf]
      %v1747 = vld [vmem:[%s7 + $0x30] sm:$0xf]
      %v1748 = vld [vmem:[%s7 + $0x34] sm:$0xf]
      %v1749 = vld [vmem:[%s7 + $0x38] sm:$0xf]
      %v1750 = vld [vmem:[%s7 + $0x3c] sm:$0xf]
      %v1751 = vld [vmem:[%s8] sm:$0x1]
      %v1753 = vlaneseq
      %v1754 = vshrl.u32 %v1753, 7
      %v1755 = vsub.s32 0, %v1754
      %v1756 = vrot.slane %v1751, %v1755
      %v1774 = vunpack.c.l.b16 %v1735
      %v1775 = vunpack.c.l.b16 %v1736
      %v1776 = vunpack.c.l.b16 %v1737
      %v1777 = vunpack.c.l.b16 %v1738
      %v1778 = vunpack.c.l.b16 %v1739
      %v1779 = vunpack.c.l.b16 %v1740
      %v1780 = vunpack.c.l.b16 %v1741
      %v1781 = vunpack.c.l.b16 %v1742
      %v1782 = vunpack.c.l.b16 %v1743
      %v1783 = vunpack.c.l.b16 %v1744
      %v1784 = vunpack.c.l.b16 %v1745
      %v1785 = vunpack.c.l.b16 %v1746
      %v1786 = vunpack.c.l.b16 %v1747
      %v1787 = vunpack.c.l.b16 %v1748
      %v1788 = vunpack.c.l.b16 %v1749
      %v1789 = vunpack.c.l.b16 %v1750
      %v1790 = vpack.c.b16 %v1775, %v1774
      %v1791 = vpack.c.b16 %v1777, %v1776
      %v1792 = vpack.c.b16 %v1779, %v1778
      %v1793 = vpack.c.b16 %v1781, %v1780
      %v1794 = vpack.c.b16 %v1783, %v1782
      %v1795 = vpack.c.b16 %v1785, %v1784
      %v1796 = vpack.c.b16 %v1787, %v1786
      %v1797 = vpack.c.b16 %v1789, %v1788
      %1806 = vmatprep.subr.bf16.mxu0 0
      %1807 = vmatpush1.bf16.msra.mxu0 %v1790
      %1808 = vmatprep.subr.bf16.mxu0 0
      %1809 = vmatpush1.bf16.msra.mxu0 %v1791
      %1810 = vmatprep.subr.bf16.mxu0 0
      %1811 = vmatpush1.bf16.msra.mxu0 %v1792
      %1812 = vmatprep.subr.bf16.mxu0 0
      %1813 = vmatpush1.bf16.msra.mxu0 %v1793
      %1814 = vmatprep.subr.bf16.mxu0 0
      %1815 = vmatpush1.bf16.msra.mxu0 %v1794
      %1816 = vmatprep.subr.bf16.mxu0 0
      %1817 = vmatpush1.bf16.msra.mxu0 %v1795
      %1818 = vmatprep.subr.bf16.mxu0 0
      %1819 = vmatpush1.bf16.msra.mxu0 %v1796
      %1820 = vmatprep.subr.bf16.mxu0 0
      %1821 = vmatpush1.bf16.msra.mxu0 %v1797
      %1822 = vmatprep.subr.bf16.mxu0 0
      %1823 = vmatpush1.bf16.msra.mxu0 0
      %1824 = vmatprep.subr.bf16.mxu0 0
      %1825 = vmatpush1.bf16.msra.mxu0 0
      %1826 = vmatprep.subr.bf16.mxu0 0
      %1827 = vmatpush1.bf16.msra.mxu0 0
      %1828 = vmatprep.subr.bf16.mxu0 0
      %1829 = vmatpush1.bf16.msra.mxu0 0
      %1830 = vmatprep.subr.bf16.mxu0 0
      %1831 = vmatpush1.bf16.msra.mxu0 0
      %1832 = vmatprep.subr.bf16.mxu0 0
      %1833 = vmatpush1.bf16.msra.mxu0 0
      %1834 = vmatprep.subr.bf16.mxu0 0
      %1835 = vmatpush1.bf16.msra.mxu0 0
      %1836 = vmatprep.subr.bf16.mxu0 0
      %1837 = vmatpush1.bf16.msra.mxu0 0
      %1838 = vmatprep.mubr.bf16.mxu0 0
      %1839 = vmatmul.mubr.bf16.gmra.mrb[0].mxu0 %v1734
      %v1840 = vpop.f32.mrb[0].mxu0
      %v1841 = vadd.f32 %v1756, %v1840
      %v1842 = vpop.f32.mrb[0].mxu0
      %v1843 = vpop.f32.mrb[0].mxu0
      %v1844 = vpop.f32.mrb[0].mxu0
      %1845 = vdwg.mxu0
      %v1846 = vmax.f32 %v1841, 0.0
      %v1847 = vpack.c.bf16 %v1846, %v1846
      %v1848 = vld [vmem:[%s9] sm:$0xf]
      %v1849 = vld [vmem:[%s9 + $0x4] sm:$0xf]
      %v1850 = vld [vmem:[%s9 + $0x8] sm:$0xf]
      %v1851 = vld [vmem:[%s9 + $0xc] sm:$0xf]
      %v1852 = vld [vmem:[%s9 + $0x10] sm:$0xf]
      %v1853 = vld [vmem:[%s9 + $0x14] sm:$0xf]
      %v1854 = vld [vmem:[%s9 + $0x18] sm:$0xf]
      %v1855 = vld [vmem:[%s9 + $0x1c] sm:$0xf]
      %v1856 = vld [vmem:[%s9 + $0x20] sm:$0xf]
      %v1857 = vld [vmem:[%s9 + $0x24] sm:$0xf]
      %v1858 = vld [vmem:[%s9 + $0x28] sm:$0xf]
      %v1859 = vld [vmem:[%s9 + $0x2c] sm:$0xf]
      %v1860 = vld [vmem:[%s9 + $0x30] sm:$0xf]
      %v1861 = vld [vmem:[%s9 + $0x34] sm:$0xf]
      %v1862 = vld [vmem:[%s9 + $0x38] sm:$0xf]
      %v1863 = vld [vmem:[%s9 + $0x3c] sm:$0xf]
      %v1864 = vld [vmem:[%s10] sm:$0x1]
      %v1866 = vlaneseq
      %v1867 = vshrl.u32 %v1866, 7
      %v1868 = vsub.s32 0, %v1867
      %v1869 = vrot.slane %v1864, %v1868
      %v1887 = vunpack.c.l.b16 %v1848
      %v1888 = vunpack.c.l.b16 %v1849
      %v1889 = vunpack.c.l.b16 %v1850
      %v1890 = vunpack.c.l.b16 %v1851
      %v1891 = vunpack.c.l.b16 %v1852
      %v1892 = vunpack.c.l.b16 %v1853
      %v1893 = vunpack.c.l.b16 %v1854
      %v1894 = vunpack.c.l.b16 %v1855
      %v1895 = vunpack.c.l.b16 %v1856
      %v1896 = vunpack.c.l.b16 %v1857
      %v1897 = vunpack.c.l.b16 %v1858
      %v1898 = vunpack.c.l.b16 %v1859
      %v1899 = vunpack.c.l.b16 %v1860
      %v1900 = vunpack.c.l.b16 %v1861
      %v1901 = vunpack.c.l.b16 %v1862
      %v1902 = vunpack.c.l.b16 %v1863
      %v1903 = vpack.c.b16 %v1888, %v1887
      %v1904 = vpack.c.b16 %v1890, %v1889
      %v1905 = vpack.c.b16 %v1892, %v1891
      %v1906 = vpack.c.b16 %v1894, %v1893
      %v1907 = vpack.c.b16 %v1896, %v1895
      %v1908 = vpack.c.b16 %v1898, %v1897
      %v1909 = vpack.c.b16 %v1900, %v1899
      %v1910 = vpack.c.b16 %v1902, %v1901
      %1919 = vmatprep.subr.bf16.mxu0 0
      %1920 = vmatpush1.bf16.msra.mxu0 %v1903
      %1921 = vmatprep.subr.bf16.mxu0 0
      %1922 = vmatpush1.bf16.msra.mxu0 %v1904
      %1923 = vmatprep.subr.bf16.mxu0 0
      %1924 = vmatpush1.bf16.msra.mxu0 %v1905
      %1925 = vmatprep.subr.bf16.mxu0 0
      %1926 = vmatpush1.bf16.msra.mxu0 %v1906
      %1927 = vmatprep.subr.bf16.mxu0 0
      %1928 = vmatpush1.bf16.msra.mxu0 %v1907
      %1929 = vmatprep.subr.bf16.mxu0 0
      %1930 = vmatpush1.bf16.msra.mxu0 %v1908
      %1931 = vmatprep.subr.bf16.mxu0 0
      %1932 = vmatpush1.bf16.msra.mxu0 %v1909
      %1933 = vmatprep.subr.bf16.mxu0 0
      %1934 = vmatpush1.bf16.msra.mxu0 %v1910
      %1935 = vmatprep.subr.bf16.mxu0 0
      %1936 = vmatpush1.bf16.msra.mxu0 0
      %1937 = vmatprep.subr.bf16.mxu0 0
      %1938 = vmatpush1.bf16.msra.mxu0 0
      %1939 = vmatprep.subr.bf16.mxu0 0
      %1940 = vmatpush1.bf16.msra.mxu0 0
      %1941 = vmatprep.subr.bf16.mxu0 0
      %1942 = vmatpush1.bf16.msra.mxu0 0
      %1943 = vmatprep.subr.bf16.mxu0 0
      %1944 = vmatpush1.bf16.msra.mxu0 0
      %1945 = vmatprep.subr.bf16.mxu0 0
      %1946 = vmatpush1.bf16.msra.mxu0 0
      %1947 = vmatprep.subr.bf16.mxu0 0
      %1948 = vmatpush1.bf16.msra.mxu0 0
      %1949 = vmatprep.subr.bf16.mxu0 0
      %1950 = vmatpush1.bf16.msra.mxu0 0
      %1951 = vmatprep.mubr.bf16.mxu0 0
      %1952 = vmatmul.mubr.bf16.gmra.mrb[0].mxu0 %v1847
      %v1953 = vpop.f32.mrb[0].mxu0
      %v1954 = vadd.f32 %v1869, %v1953
      %v1955 = vpop.f32.mrb[0].mxu0
      %v1956 = vpop.f32.mrb[0].mxu0
      %v1957 = vpop.f32.mrb[0].mxu0
      %1958 = vdwg.mxu0
      %1959 = vst [vmem:[%s384] sm:$0xff] %v1954
      %p1960 = scmp.lt.s32.totalorder %s22, 1
      %s1961 = scalar_select %p1960, %s22, 1
      %s1962 = smul.addr %s1961, 8
      %s1963 = scalar_lea.vmem %s11, %s1962
      // Predicated region
      $region65: #{lenet_forward.1} parent=63 // pred_check
        %p1964 = pneg %p276
      $region66: #{lenet_forward.1} parent=63 // pred_check_branch
        %1966 = sbr.rel (%p1964) target = $region68
      $region67: #{lenet_forward.1} parent=63 // pred_region
        _
      $region68: #{lenet_forward.1} parent=63 // pred_fallthru
        _
    $region64: #{lenet_forward.1} parent=5 // pred_fallthru
      _
    %p1967 = scmp.le.s32.totalorder 2, %s17
    // Predicated region
    $region69: #{lenet_forward.1} parent=5 // pred_check
      %p1968 = pneg %p1967
    $region70: #{lenet_forward.1} parent=5 // pred_check_branch
      %1970 = sbr.rel (%p1968) target = $region72
    $region71: #{lenet_forward.1} parent=5 // pred_region
      %s1971 = ssub.s32 %s17, 2
      // Predicated region
      $region73: #{lenet_forward.1} parent=71 // pred_check
        %p1972 = pneg %p282
      $region74: #{lenet_forward.1} parent=71 // pred_check_branch
        %1974 = sbr.rel (%p1972) target = $region76
      $region75: #{lenet_forward.1} parent=71 // pred_region
        %p1975 = scmp.lt.s32.totalorder %s23, 1
        %s1976 = scalar_select %p1975, %s23, 1
        %s1977 = smul.addr %s1976, 8
        %s1978 = scalar_lea.vmem %s11, %s1977
      $region76: #{lenet_forward.1} parent=71 // pred_fallthru
        _
    $region72: #{lenet_forward.1} parent=5 // pred_fallthru
      _
  $region6: #{lenet_forward.1} parent=0 // loop_footer
    %s21 = sadd.s32 1, %s17
  $region7: #{lenet_forward.1} parent=0 // loop_footer_branch
    %16 = sbr.rel target = $region3
  $region8: #{lenet_forward.1} parent=0 // loop_exit
    _

</llo_original>
